<compile_context>
chip_gen: v5e
topology: v5e:2x2
jax: 0.10.0
libtpu: 0.0.40
codegen_flags: <defaults>
</compile_context>

<pallas_src>
import functools

import jax
import jax.numpy as jnp
from jax import lax
from jax.experimental import pallas as pl
from jax.experimental.pallas import tpu as pltpu


def _round_up(x, m):
    return ((x + m - 1) // m) * m


def word_att_kernel(gi_ref, h0_ref,
                    whh_f_ref, bhh_f_ref, whh_b_ref, bhh_b_ref,
                    ww_ref, wb_ref, cw_ref,
                    out_ref, hout_ref,
                    ffwd_ref, fbwd_ref,
                    *, unroll):
    S, Bt, six_h = gi_ref.shape
    H = six_h // 6

    # Small recurrent weights, read once (stay resident in vregs).
    whh_f = whh_f_ref[...]          # [H, 3H]
    whh_b = whh_b_ref[...]          # [H, 3H]
    bhh_f = bhh_f_ref[...]          # [1, 3H]
    bhh_b = bhh_b_ref[...]          # [1, 3H]

    def gru_step(gi_dir, h, whh, bhh):
        # gi_dir: [Bt, 3H] (input projection + input bias, hoisted), h: [Bt, H]
        gh = jnp.dot(h, whh, preferred_element_type=jnp.float32) + bhh
        r = jax.nn.sigmoid(gi_dir[:, 0:H] + gh[:, 0:H])
        z = jax.nn.sigmoid(gi_dir[:, H:2 * H] + gh[:, H:2 * H])
        n = jnp.tanh(gi_dir[:, 2 * H:3 * H] + r * gh[:, 2 * H:3 * H])
        return (1.0 - z) * n + z * h

    # ---- fused bidirectional recurrence (two independent chains per step) ----
    def step(t, carry):
        h_f, h_b = carry
        tb = S - 1 - t
        gi_f = gi_ref[t][:, 0:3 * H]           # forward-direction gates
        gi_b = gi_ref[tb][:, 3 * H:6 * H]      # backward-direction gates
        h_f = gru_step(gi_f, h_f, whh_f, bhh_f)
        h_b = gru_step(gi_b, h_b, whh_b, bhh_b)
        ffwd_ref[t] = h_f
        fbwd_ref[tb] = h_b
        return (h_f, h_b)

    h_f, h_b = lax.fori_loop(0, S, step, (h0_ref[0], h0_ref[1]), unroll=unroll)
    hout_ref[0] = h_f
    hout_ref[1] = h_b

    # ---- attention: fully vectorized over (seq, batch) ----
    f_all = jnp.concatenate([ffwd_ref[...], fbwd_ref[...]], axis=-1)   # [S, Bt, 2H]
    f_flat = f_all.reshape(S * Bt, 2 * H)                              # merge leading dims

    ww = ww_ref[...]          # [2H, 2H]
    wb = wb_ref[...]          # [1, 2H]
    cw = cw_ref[...]          # [2H, 1]

    # double tanh matches the HAN matrix_mul helper (intentional)
    u = jnp.tanh(jnp.dot(f_flat, ww, preferred_element_type=jnp.float32) + wb)
    s = jnp.tanh(jnp.dot(u, cw, preferred_element_type=jnp.float32))   # [S*Bt, 1]
    s3 = s.reshape(S, Bt, 1)

    # softmax over the sequence axis (per batch column)
    m = jnp.max(s3, axis=0, keepdims=True)
    e = jnp.exp(s3 - m)
    alpha = e / jnp.sum(e, axis=0, keepdims=True)                      # [S, Bt, 1]

    # weighted sum over timesteps
    out_ref[0] = jnp.sum(f_all * alpha, axis=0)                        # [Bt, 2H]


def word_att_forward(x, hidden_state, params):
    """x: [S, B] int32 token ids; hidden_state: [2, B, H] float32."""
    S, B = x.shape
    H = hidden_state.shape[2]

    # Batch padding / tiling: sublane dim must stay a multiple of 8.
    Bt = min(128, _round_up(B, 8))          # batch tile per grid cell
    Bp = _round_up(B, Bt)                   # padded batch
    x_p = jnp.pad(x, ((0, 0), (0, Bp - B)))
    h0_p = jnp.pad(hidden_state, ((0, 0), (0, Bp - B), (0, 0))).astype(jnp.float32)

    # Glue (plain JAX): embedding gather + hoisted GRU input projections.
    # Stacking [W_ih_fwd | W_ih_bwd] makes this ONE [S*B, E] x [E, 6H] GEMM.
    emb = params["embedding"][x_p].astype(jnp.float32)                         # [S, Bp, E]
    wih_cat = jnp.concatenate([params["wih_f"].T, params["wih_b"].T], axis=1)  # [E, 6H]
    bih_cat = jnp.concatenate([params["bih_f"], params["bih_b"]], axis=1)      # [1, 6H]
    gi = jnp.einsum("sbe,ef->sbf", emb, wih_cat) + bih_cat                     # [S, Bp, 6H]

    whh_f = params["whh_f"].T          # [H, 3H]
    whh_b = params["whh_b"].T          # [H, 3H]
    bhh_f = params["bhh_f"]            # [1, 3H]
    bhh_b = params["bhh_b"]            # [1, 3H]
    ww = params["word_weight"]         # [2H, 2H]
    wb = params["word_bias"]           # [1, 2H]
    cw = params["context_weight"]      # [2H, 1]

    def full_spec(arr):
        nd = arr.ndim
        return pl.BlockSpec(arr.shape, lambda j, _nd=nd: (0,) * _nd)

    kernel = functools.partial(word_att_kernel,
                               unroll=True if S <= 32 else 8)

    out_shape = (jax.ShapeDtypeStruct((1, Bp, 2 * H), jnp.float32),
                 jax.ShapeDtypeStruct((2, Bp, H), jnp.float32))

    att_out, h_out = pl.pallas_call(
        kernel,
        out_shape=out_shape,
        grid=(Bp // Bt,),
        in_specs=[
            pl.BlockSpec((S, Bt, 6 * H), lambda j: (0, j, 0)),   # gi
            pl.BlockSpec((2, Bt, H), lambda j: (0, j, 0)),       # h0
            full_spec(whh_f), full_spec(bhh_f),
            full_spec(whh_b), full_spec(bhh_b),
            full_spec(ww), full_spec(wb), full_spec(cw),
        ],
        out_specs=(
            pl.BlockSpec((1, Bt, 2 * H), lambda j: (0, j, 0)),
            pl.BlockSpec((2, Bt, H), lambda j: (0, j, 0)),
        ),
        scratch_shapes=[
            pltpu.VMEM((S, Bt, H), jnp.float32),   # forward GRU outputs
            pltpu.VMEM((S, Bt, H), jnp.float32),   # backward GRU outputs
        ],
        compiler_params=pltpu.CompilerParams(
            dimension_semantics=("parallel",)),
    )(gi, h0_p, whh_f, bhh_f, whh_b, bhh_b, ww, wb, cw)

    return att_out[:, :B, :], h_out[:, :B, :]


def word_att_reference(x, hidden_state, params):
    """Pure-JAX reference mirroring the PyTorch module (for validation)."""
    emb = params["embedding"][x].astype(jnp.float32)   # [S, B, E]
    S = emb.shape[0]
    H = hidden_state.shape[2]

    def cell(x_t, h, wih, whh, bih, bhh):
        gi = x_t @ wih.T + bih
        gh = h @ whh.T + bhh
        r = jax.nn.sigmoid(gi[:, 0:H] + gh[:, 0:H])
        z = jax.nn.sigmoid(gi[:, H:2 * H] + gh[:, H:2 * H])
        n = jnp.tanh(gi[:, 2 * H:3 * H] + r * gh[:, 2 * H:3 * H])
        return (1.0 - z) * n + z * h

    h_f, h_b = hidden_state[0], hidden_state[1]
    ffwd, fbwd = [], [None] * S
    for t in range(S):
        h_f = cell(emb[t], h_f, params["wih_f"], params["whh_f"],
                   params["bih_f"], params["bhh_f"])
        ffwd.append(h_f)
    for t in range(S - 1, -1, -1):
        h_b = cell(emb[t], h_b, params["wih_b"], params["whh_b"],
                   params["bih_b"], params["bhh_b"])
        fbwd[t] = h_b
    f_out = jnp.stack([jnp.concatenate([ffwd[t], fbwd[t]], axis=-1)
                       for t in range(S)], axis=0)                     # [S, B, 2H]
    u = jnp.tanh(f_out @ params["word_weight"] + params["word_bias"])
    s = jnp.tanh(u @ params["context_weight"])[..., 0]                 # [S, B]
    alpha = jax.nn.softmax(s, axis=0)
    out = jnp.sum(f_out * alpha[..., None], axis=0, keepdims=True)     # [1, B, 2H]
    return out, jnp.stack([h_f, h_b], axis=0)


def init_params(key, dict_len, embed_size, hidden_size):
    H = hidden_size
    ks = jax.random.split(key, 12)
    bound = 1.0 / (H ** 0.5)

    def unif(k, shape):
        return jax.random.uniform(k, shape, jnp.float32, -bound, bound)

    return dict(
        # nn.Embedding default init: N(0, 1)
        embedding=jax.random.normal(ks[0], (dict_len, embed_size), jnp.float32),
        # nn.GRU default init: U(-1/sqrt(H), 1/sqrt(H)); PyTorch layout [3H, in]
        wih_f=unif(ks[1], (3 * H, embed_size)),
        whh_f=unif(ks[2], (3 * H, H)),
        bih_f=unif(ks[3], (1, 3 * H)),
        bhh_f=unif(ks[4], (1, 3 * H)),
        wih_b=unif(ks[5], (3 * H, embed_size)),
        whh_b=unif(ks[6], (3 * H, H)),
        bih_b=unif(ks[7], (1, 3 * H)),
        bhh_b=unif(ks[8], (1, 3 * H)),
        # attention params: N(0, 0.05)
        word_weight=0.05 * jax.random.normal(ks[9], (2 * H, 2 * H), jnp.float32),
        word_bias=0.05 * jax.random.normal(ks[10], (1, 2 * H), jnp.float32),
        context_weight=0.05 * jax.random.normal(ks[11], (2 * H, 1), jnp.float32),
    )


if __name__ == "__main__":
    DICT_LEN = 50
    EMBED_SIZE = 16
    WORD_HIDDEN = 16
    SEQ_LEN = 8
    BATCH = 4

    key = jax.random.PRNGKey(0)
    k_params, k_x, k_h = jax.random.split(key, 3)

    params = init_params(k_params, DICT_LEN, EMBED_SIZE, WORD_HIDDEN)
    x = jax.random.randint(k_x, (SEQ_LEN, BATCH), 0, DICT_LEN, dtype=jnp.int32)
    hidden_state = 0.1 * jax.random.normal(
        k_h, (2, BATCH, WORD_HIDDEN), jnp.float32)

    fwd = jax.jit(word_att_forward)
    att_out, h_out = fwd(x, hidden_state, params)
    jax.block_until_ready((att_out, h_out))

    assert att_out.shape == (1, BATCH, 2 * WORD_HIDDEN)
    assert h_out.shape == (2, BATCH, WORD_HIDDEN)
    assert bool(jnp.all(jnp.isfinite(att_out))) and bool(jnp.all(jnp.isfinite(h_out)))

    # Validate against the pure-JAX reference (tolerance covers MXU bf16 passes).
    ref_out, ref_h = word_att_reference(x, hidden_state, params)
    assert bool(jnp.allclose(att_out, ref_out, atol=3e-2, rtol=3e-2))
    assert bool(jnp.allclose(h_out, ref_h, atol=3e-2, rtol=3e-2))

    print("KERNEL_OK")
</pallas_src>

<mosaic_0001>
module attributes {stable_mosaic.version = 11 : i64} {
  func.func @word_att_kernel(%arg0: i32, %arg1: memref<8x8x96xf32, #tpu.memory_space<vmem>>, %arg2: memref<2x8x16xf32, #tpu.memory_space<vmem>>, %arg3: memref<16x48xf32, #tpu.memory_space<vmem>>, %arg4: memref<1x48xf32, #tpu.memory_space<vmem>>, %arg5: memref<16x48xf32, #tpu.memory_space<vmem>>, %arg6: memref<1x48xf32, #tpu.memory_space<vmem>>, %arg7: memref<32x32xf32, #tpu.memory_space<vmem>>, %arg8: memref<1x32xf32, #tpu.memory_space<vmem>>, %arg9: memref<32x1xf32, #tpu.memory_space<vmem>>, %arg10: memref<1x8x32xf32, #tpu.memory_space<vmem>>, %arg11: memref<2x8x16xf32, #tpu.memory_space<vmem>>, %arg12: memref<8x8x16xf32, #tpu.memory_space<vmem>>, %arg13: memref<8x8x16xf32, #tpu.memory_space<vmem>>) attributes {dimension_semantics = [#tpu.dimension_semantics<parallel>], iteration_bounds = array<i64: 1>, scalar_prefetch = 0 : i64, scratch_operands = 2 : i64, tpu.core_type = #tpu.core_type<tc>, window_params = [{transform_indices = @transform_0, window_bounds = array<i64: 8, 8, 96>}, {transform_indices = @transform_1, window_bounds = array<i64: 2, 8, 16>}, {pipeline_mode = #tpu.pipeline_mode<synchronous>, transform_indices = @transform_2, window_bounds = array<i64: 16, 48>}, {pipeline_mode = #tpu.pipeline_mode<synchronous>, transform_indices = @transform_3, window_bounds = array<i64: 1, 48>}, {pipeline_mode = #tpu.pipeline_mode<synchronous>, transform_indices = @transform_4, window_bounds = array<i64: 16, 48>}, {pipeline_mode = #tpu.pipeline_mode<synchronous>, transform_indices = @transform_5, window_bounds = array<i64: 1, 48>}, {pipeline_mode = #tpu.pipeline_mode<synchronous>, transform_indices = @transform_6, window_bounds = array<i64: 32, 32>}, {pipeline_mode = #tpu.pipeline_mode<synchronous>, transform_indices = @transform_7, window_bounds = array<i64: 1, 32>}, {pipeline_mode = #tpu.pipeline_mode<synchronous>, transform_indices = @transform_8, window_bounds = array<i64: 32, 1>}, {transform_indices = @transform_9, window_bounds = array<i64: 1, 8, 32>}, {transform_indices = @transform_10, window_bounds = array<i64: 2, 8, 16>}]} {
    %c0 = arith.constant 0 : index
    %c0_0 = arith.constant 0 : index
    %0 = vector.load %arg3[%c0, %c0_0] : memref<16x48xf32, #tpu.memory_space<vmem>>, vector<16x48xf32>
    %c0_1 = arith.constant 0 : index
    %c0_2 = arith.constant 0 : index
    %1 = vector.load %arg5[%c0_1, %c0_2] : memref<16x48xf32, #tpu.memory_space<vmem>>, vector<16x48xf32>
    %c0_3 = arith.constant 0 : index
    %c0_4 = arith.constant 0 : index
    %2 = vector.load %arg4[%c0_3, %c0_4] : memref<1x48xf32, #tpu.memory_space<vmem>>, vector<1x48xf32>
    %c0_5 = arith.constant 0 : index
    %c0_6 = arith.constant 0 : index
    %3 = vector.load %arg6[%c0_5, %c0_6] : memref<1x48xf32, #tpu.memory_space<vmem>>, vector<1x48xf32>
    %c0_7 = arith.constant 0 : index
    %c0_8 = arith.constant 0 : index
    %c0_9 = arith.constant 0 : index
    %4 = vector.load %arg2[%c0_7, %c0_8, %c0_9] : memref<2x8x16xf32, #tpu.memory_space<vmem>>, vector<1x8x16xf32>
    %5 = vector.shape_cast %4 : vector<1x8x16xf32> to vector<8x16xf32>
    %c1 = arith.constant 1 : index
    %c0_10 = arith.constant 0 : index
    %c0_11 = arith.constant 0 : index
    %6 = vector.load %arg2[%c1, %c0_10, %c0_11] : memref<2x8x16xf32, #tpu.memory_space<vmem>>, vector<1x8x16xf32>
    %7 = vector.shape_cast %6 : vector<1x8x16xf32> to vector<8x16xf32>
    %c0_i32 = arith.constant 0 : i32
    %c7_i32 = arith.constant 7 : i32
    %8 = arith.subi %c7_i32, %c0_i32 : i32
    %9 = arith.index_cast %c0_i32 : i32 to index
    %c0_12 = arith.constant 0 : index
    %c0_13 = arith.constant 0 : index
    %10 = vector.load %arg1[%9, %c0_12, %c0_13] : memref<8x8x96xf32, #tpu.memory_space<vmem>>, vector<1x8x96xf32>
    %11 = vector.shape_cast %10 : vector<1x8x96xf32> to vector<8x96xf32>
    %12 = vector.extract_strided_slice %11 {offsets = [0, 0], sizes = [8, 48], strides = [1, 1]} : vector<8x96xf32> to vector<8x48xf32>
    %13 = arith.index_cast %8 : i32 to index
    %c0_14 = arith.constant 0 : index
    %c0_15 = arith.constant 0 : index
    %14 = vector.load %arg1[%13, %c0_14, %c0_15] : memref<8x8x96xf32, #tpu.memory_space<vmem>>, vector<1x8x96xf32>
    %15 = vector.shape_cast %14 : vector<1x8x96xf32> to vector<8x96xf32>
    %16 = vector.extract_strided_slice %15 {offsets = [0, 48], sizes = [8, 48], strides = [1, 1]} : vector<8x96xf32> to vector<8x48xf32>
    %cst = arith.constant dense<0.000000e+00> : vector<8x48xf32>
    %17 = tpu.matmul %5, %0, %cst {dimension_numbers = #tpu.dot_dimension_numbers<[1], [0], [0], [1], [0, 0, 1, 1], [], []>} : vector<8x16xf32>, vector<16x48xf32>, vector<8x48xf32> -> vector<8x48xf32>
    %18 = vector.broadcast %2 : vector<1x48xf32> to vector<8x48xf32>
    %19 = arith.addf %17, %18 : vector<8x48xf32>
    %20 = vector.extract_strided_slice %12 {offsets = [0, 0], sizes = [8, 16], strides = [1, 1]} : vector<8x48xf32> to vector<8x16xf32>
    %21 = vector.extract_strided_slice %19 {offsets = [0, 0], sizes = [8, 16], strides = [1, 1]} : vector<8x48xf32> to vector<8x16xf32>
    %22 = arith.addf %20, %21 : vector<8x16xf32>
    %23 = arith.negf %22 : vector<8x16xf32>
    %24 = math.exp %23 : vector<8x16xf32>
    %cst_16 = arith.constant 1.000000e+00 : f32
    %25 = vector.broadcast %cst_16 : f32 to vector<8x16xf32>
    %26 = arith.addf %25, %24 : vector<8x16xf32>
    %27 = arith.divf %25, %26 : vector<8x16xf32>
    %28 = vector.extract_strided_slice %12 {offsets = [0, 16], sizes = [8, 16], strides = [1, 1]} : vector<8x48xf32> to vector<8x16xf32>
    %29 = vector.extract_strided_slice %19 {offsets = [0, 16], sizes = [8, 16], strides = [1, 1]} : vector<8x48xf32> to vector<8x16xf32>
    %30 = arith.addf %28, %29 : vector<8x16xf32>
    %31 = arith.negf %30 : vector<8x16xf32>
    %32 = math.exp %31 : vector<8x16xf32>
    %cst_17 = arith.constant 1.000000e+00 : f32
    %33 = vector.broadcast %cst_17 : f32 to vector<8x16xf32>
    %34 = arith.addf %33, %32 : vector<8x16xf32>
    %35 = arith.divf %33, %34 : vector<8x16xf32>
    %36 = vector.extract_strided_slice %12 {offsets = [0, 32], sizes = [8, 16], strides = [1, 1]} : vector<8x48xf32> to vector<8x16xf32>
    %37 = vector.extract_strided_slice %19 {offsets = [0, 32], sizes = [8, 16], strides = [1, 1]} : vector<8x48xf32> to vector<8x16xf32>
    %38 = arith.mulf %27, %37 : vector<8x16xf32>
    %39 = arith.addf %36, %38 : vector<8x16xf32>
    %40 = math.tanh %39 : vector<8x16xf32>
    %cst_18 = arith.constant 1.000000e+00 : f32
    %41 = vector.broadcast %cst_18 : f32 to vector<8x16xf32>
    %42 = arith.subf %41, %35 : vector<8x16xf32>
    %43 = arith.mulf %42, %40 : vector<8x16xf32>
    %44 = arith.mulf %35, %5 : vector<8x16xf32>
    %45 = arith.addf %43, %44 : vector<8x16xf32>
    %cst_19 = arith.constant dense<0.000000e+00> : vector<8x48xf32>
    %46 = tpu.matmul %7, %1, %cst_19 {dimension_numbers = #tpu.dot_dimension_numbers<[1], [0], [0], [1], [0, 0, 1, 1], [], []>} : vector<8x16xf32>, vector<16x48xf32>, vector<8x48xf32> -> vector<8x48xf32>
    %47 = vector.broadcast %3 : vector<1x48xf32> to vector<8x48xf32>
    %48 = arith.addf %46, %47 : vector<8x48xf32>
    %49 = vector.extract_strided_slice %16 {offsets = [0, 0], sizes = [8, 16], strides = [1, 1]} : vector<8x48xf32> to vector<8x16xf32>
    %50 = vector.extract_strided_slice %48 {offsets = [0, 0], sizes = [8, 16], strides = [1, 1]} : vector<8x48xf32> to vector<8x16xf32>
    %51 = arith.addf %49, %50 : vector<8x16xf32>
    %52 = arith.negf %51 : vector<8x16xf32>
    %53 = math.exp %52 : vector<8x16xf32>
    %cst_20 = arith.constant 1.000000e+00 : f32
    %54 = vector.broadcast %cst_20 : f32 to vector<8x16xf32>
    %55 = arith.addf %54, %53 : vector<8x16xf32>
    %56 = arith.divf %54, %55 : vector<8x16xf32>
    %57 = vector.extract_strided_slice %16 {offsets = [0, 16], sizes = [8, 16], strides = [1, 1]} : vector<8x48xf32> to vector<8x16xf32>
    %58 = vector.extract_strided_slice %48 {offsets = [0, 16], sizes = [8, 16], strides = [1, 1]} : vector<8x48xf32> to vector<8x16xf32>
    %59 = arith.addf %57, %58 : vector<8x16xf32>
    %60 = arith.negf %59 : vector<8x16xf32>
    %61 = math.exp %60 : vector<8x16xf32>
    %cst_21 = arith.constant 1.000000e+00 : f32
    %62 = vector.broadcast %cst_21 : f32 to vector<8x16xf32>
    %63 = arith.addf %62, %61 : vector<8x16xf32>
    %64 = arith.divf %62, %63 : vector<8x16xf32>
    %65 = vector.extract_strided_slice %16 {offsets = [0, 32], sizes = [8, 16], strides = [1, 1]} : vector<8x48xf32> to vector<8x16xf32>
    %66 = vector.extract_strided_slice %48 {offsets = [0, 32], sizes = [8, 16], strides = [1, 1]} : vector<8x48xf32> to vector<8x16xf32>
    %67 = arith.mulf %56, %66 : vector<8x16xf32>
    %68 = arith.addf %65, %67 : vector<8x16xf32>
    %69 = math.tanh %68 : vector<8x16xf32>
    %cst_22 = arith.constant 1.000000e+00 : f32
    %70 = vector.broadcast %cst_22 : f32 to vector<8x16xf32>
    %71 = arith.subf %70, %64 : vector<8x16xf32>
    %72 = arith.mulf %71, %69 : vector<8x16xf32>
    %73 = arith.mulf %64, %7 : vector<8x16xf32>
    %74 = arith.addf %72, %73 : vector<8x16xf32>
    %75 = arith.index_cast %c0_i32 : i32 to index
    %c0_23 = arith.constant 0 : index
    %c0_24 = arith.constant 0 : index
    %76 = vector.load %arg12[%75, %c0_23, %c0_24] : memref<8x8x16xf32, #tpu.memory_space<vmem>>, vector<1x8x16xf32>
    %77 = vector.shape_cast %76 : vector<1x8x16xf32> to vector<8x16xf32>
    %78 = vector.shape_cast %45 : vector<8x16xf32> to vector<1x8x16xf32>
    tpu.vector_store %arg12[%75, %c0_23, %c0_24], %78 {strides = array<i32>} : memref<8x8x16xf32, #tpu.memory_space<vmem>>, vector<1x8x16xf32>,
    %79 = arith.index_cast %8 : i32 to index
    %c0_25 = arith.constant 0 : index
    %c0_26 = arith.constant 0 : index
    %80 = vector.load %arg13[%79, %c0_25, %c0_26] : memref<8x8x16xf32, #tpu.memory_space<vmem>>, vector<1x8x16xf32>
    %81 = vector.shape_cast %80 : vector<1x8x16xf32> to vector<8x16xf32>
    %82 = vector.shape_cast %74 : vector<8x16xf32> to vector<1x8x16xf32>
    tpu.vector_store %arg13[%79, %c0_25, %c0_26], %82 {strides = array<i32>} : memref<8x8x16xf32, #tpu.memory_space<vmem>>, vector<1x8x16xf32>,
    %c1_i32 = arith.constant 1 : i32
    %c7_i32_27 = arith.constant 7 : i32
    %83 = arith.subi %c7_i32_27, %c1_i32 : i32
    %84 = arith.index_cast %c1_i32 : i32 to index
    %c0_28 = arith.constant 0 : index
    %c0_29 = arith.constant 0 : index
    %85 = vector.load %arg1[%84, %c0_28, %c0_29] : memref<8x8x96xf32, #tpu.memory_space<vmem>>, vector<1x8x96xf32>
    %86 = vector.shape_cast %85 : vector<1x8x96xf32> to vector<8x96xf32>
    %87 = vector.extract_strided_slice %86 {offsets = [0, 0], sizes = [8, 48], strides = [1, 1]} : vector<8x96xf32> to vector<8x48xf32>
    %88 = arith.index_cast %83 : i32 to index
    %c0_30 = arith.constant 0 : index
    %c0_31 = arith.constant 0 : index
    %89 = vector.load %arg1[%88, %c0_30, %c0_31] : memref<8x8x96xf32, #tpu.memory_space<vmem>>, vector<1x8x96xf32>
    %90 = vector.shape_cast %89 : vector<1x8x96xf32> to vector<8x96xf32>
    %91 = vector.extract_strided_slice %90 {offsets = [0, 48], sizes = [8, 48], strides = [1, 1]} : vector<8x96xf32> to vector<8x48xf32>
    %cst_32 = arith.constant dense<0.000000e+00> : vector<8x48xf32>
    %92 = tpu.matmul %45, %0, %cst_32 {dimension_numbers = #tpu.dot_dimension_numbers<[1], [0], [0], [1], [0, 0, 1, 1], [], []>} : vector<8x16xf32>, vector<16x48xf32>, vector<8x48xf32> -> vector<8x48xf32>
    %93 = vector.broadcast %2 : vector<1x48xf32> to vector<8x48xf32>
    %94 = arith.addf %92, %93 : vector<8x48xf32>
    %95 = vector.extract_strided_slice %87 {offsets = [0, 0], sizes = [8, 16], strides = [1, 1]} : vector<8x48xf32> to vector<8x16xf32>
    %96 = vector.extract_strided_slice %94 {offsets = [0, 0], sizes = [8, 16], strides = [1, 1]} : vector<8x48xf32> to vector<8x16xf32>
    %97 = arith.addf %95, %96 : vector<8x16xf32>
    %98 = arith.negf %97 : vector<8x16xf32>
    %99 = math.exp %98 : vector<8x16xf32>
    %cst_33 = arith.constant 1.000000e+00 : f32
    %100 = vector.broadcast %cst_33 : f32 to vector<8x16xf32>
    %101 = arith.addf %100, %99 : vector<8x16xf32>
    %102 = arith.divf %100, %101 : vector<8x16xf32>
    %103 = vector.extract_strided_slice %87 {offsets = [0, 16], sizes = [8, 16], strides = [1, 1]} : vector<8x48xf32> to vector<8x16xf32>
    %104 = vector.extract_strided_slice %94 {offsets = [0, 16], sizes = [8, 16], strides = [1, 1]} : vector<8x48xf32> to vector<8x16xf32>
    %105 = arith.addf %103, %104 : vector<8x16xf32>
    %106 = arith.negf %105 : vector<8x16xf32>
    %107 = math.exp %106 : vector<8x16xf32>
    %cst_34 = arith.constant 1.000000e+00 : f32
    %108 = vector.broadcast %cst_34 : f32 to vector<8x16xf32>
    %109 = arith.addf %108, %107 : vector<8x16xf32>
    %110 = arith.divf %108, %109 : vector<8x16xf32>
    %111 = vector.extract_strided_slice %87 {offsets = [0, 32], sizes = [8, 16], strides = [1, 1]} : vector<8x48xf32> to vector<8x16xf32>
    %112 = vector.extract_strided_slice %94 {offsets = [0, 32], sizes = [8, 16], strides = [1, 1]} : vector<8x48xf32> to vector<8x16xf32>
    %113 = arith.mulf %102, %112 : vector<8x16xf32>
    %114 = arith.addf %111, %113 : vector<8x16xf32>
    %115 = math.tanh %114 : vector<8x16xf32>
    %cst_35 = arith.constant 1.000000e+00 : f32
    %116 = vector.broadcast %cst_35 : f32 to vector<8x16xf32>
    %117 = arith.subf %116, %110 : vector<8x16xf32>
    %118 = arith.mulf %117, %115 : vector<8x16xf32>
    %119 = arith.mulf %110, %45 : vector<8x16xf32>
    %120 = arith.addf %118, %119 : vector<8x16xf32>
    %cst_36 = arith.constant dense<0.000000e+00> : vector<8x48xf32>
    %121 = tpu.matmul %74, %1, %cst_36 {dimension_numbers = #tpu.dot_dimension_numbers<[1], [0], [0], [1], [0, 0, 1, 1], [], []>} : vector<8x16xf32>, vector<16x48xf32>, vector<8x48xf32> -> vector<8x48xf32>
    %122 = vector.broadcast %3 : vector<1x48xf32> to vector<8x48xf32>
    %123 = arith.addf %121, %122 : vector<8x48xf32>
    %124 = vector.extract_strided_slice %91 {offsets = [0, 0], sizes = [8, 16], strides = [1, 1]} : vector<8x48xf32> to vector<8x16xf32>
    %125 = vector.extract_strided_slice %123 {offsets = [0, 0], sizes = [8, 16], strides = [1, 1]} : vector<8x48xf32> to vector<8x16xf32>
    %126 = arith.addf %124, %125 : vector<8x16xf32>
    %127 = arith.negf %126 : vector<8x16xf32>
    %128 = math.exp %127 : vector<8x16xf32>
    %cst_37 = arith.constant 1.000000e+00 : f32
    %129 = vector.broadcast %cst_37 : f32 to vector<8x16xf32>
    %130 = arith.addf %129, %128 : vector<8x16xf32>
    %131 = arith.divf %129, %130 : vector<8x16xf32>
    %132 = vector.extract_strided_slice %91 {offsets = [0, 16], sizes = [8, 16], strides = [1, 1]} : vector<8x48xf32> to vector<8x16xf32>
    %133 = vector.extract_strided_slice %123 {offsets = [0, 16], sizes = [8, 16], strides = [1, 1]} : vector<8x48xf32> to vector<8x16xf32>
    %134 = arith.addf %132, %133 : vector<8x16xf32>
    %135 = arith.negf %134 : vector<8x16xf32>
    %136 = math.exp %135 : vector<8x16xf32>
    %cst_38 = arith.constant 1.000000e+00 : f32
    %137 = vector.broadcast %cst_38 : f32 to vector<8x16xf32>
    %138 = arith.addf %137, %136 : vector<8x16xf32>
    %139 = arith.divf %137, %138 : vector<8x16xf32>
    %140 = vector.extract_strided_slice %91 {offsets = [0, 32], sizes = [8, 16], strides = [1, 1]} : vector<8x48xf32> to vector<8x16xf32>
    %141 = vector.extract_strided_slice %123 {offsets = [0, 32], sizes = [8, 16], strides = [1, 1]} : vector<8x48xf32> to vector<8x16xf32>
    %142 = arith.mulf %131, %141 : vector<8x16xf32>
    %143 = arith.addf %140, %142 : vector<8x16xf32>
    %144 = math.tanh %143 : vector<8x16xf32>
    %cst_39 = arith.constant 1.000000e+00 : f32
    %145 = vector.broadcast %cst_39 : f32 to vector<8x16xf32>
    %146 = arith.subf %145, %139 : vector<8x16xf32>
    %147 = arith.mulf %146, %144 : vector<8x16xf32>
    %148 = arith.mulf %139, %74 : vector<8x16xf32>
    %149 = arith.addf %147, %148 : vector<8x16xf32>
    %150 = arith.index_cast %c1_i32 : i32 to index
    %c0_40 = arith.constant 0 : index
    %c0_41 = arith.constant 0 : index
    %151 = vector.load %arg12[%150, %c0_40, %c0_41] : memref<8x8x16xf32, #tpu.memory_space<vmem>>, vector<1x8x16xf32>
    %152 = vector.shape_cast %151 : vector<1x8x16xf32> to vector<8x16xf32>
    %153 = vector.shape_cast %120 : vector<8x16xf32> to vector<1x8x16xf32>
    tpu.vector_store %arg12[%150, %c0_40, %c0_41], %153 {strides = array<i32>} : memref<8x8x16xf32, #tpu.memory_space<vmem>>, vector<1x8x16xf32>,
    %154 = arith.index_cast %83 : i32 to index
    %c0_42 = arith.constant 0 : index
    %c0_43 = arith.constant 0 : index
    %155 = vector.load %arg13[%154, %c0_42, %c0_43] : memref<8x8x16xf32, #tpu.memory_space<vmem>>, vector<1x8x16xf32>
    %156 = vector.shape_cast %155 : vector<1x8x16xf32> to vector<8x16xf32>
    %157 = vector.shape_cast %149 : vector<8x16xf32> to vector<1x8x16xf32>
    tpu.vector_store %arg13[%154, %c0_42, %c0_43], %157 {strides = array<i32>} : memref<8x8x16xf32, #tpu.memory_space<vmem>>, vector<1x8x16xf32>,
    %c2_i32 = arith.constant 2 : i32
    %c7_i32_44 = arith.constant 7 : i32
    %158 = arith.subi %c7_i32_44, %c2_i32 : i32
    %159 = arith.index_cast %c2_i32 : i32 to index
    %c0_45 = arith.constant 0 : index
    %c0_46 = arith.constant 0 : index
    %160 = vector.load %arg1[%159, %c0_45, %c0_46] : memref<8x8x96xf32, #tpu.memory_space<vmem>>, vector<1x8x96xf32>
    %161 = vector.shape_cast %160 : vector<1x8x96xf32> to vector<8x96xf32>
    %162 = vector.extract_strided_slice %161 {offsets = [0, 0], sizes = [8, 48], strides = [1, 1]} : vector<8x96xf32> to vector<8x48xf32>
    %163 = arith.index_cast %158 : i32 to index
    %c0_47 = arith.constant 0 : index
    %c0_48 = arith.constant 0 : index
    %164 = vector.load %arg1[%163, %c0_47, %c0_48] : memref<8x8x96xf32, #tpu.memory_space<vmem>>, vector<1x8x96xf32>
    %165 = vector.shape_cast %164 : vector<1x8x96xf32> to vector<8x96xf32>
    %166 = vector.extract_strided_slice %165 {offsets = [0, 48], sizes = [8, 48], strides = [1, 1]} : vector<8x96xf32> to vector<8x48xf32>
    %cst_49 = arith.constant dense<0.000000e+00> : vector<8x48xf32>
    %167 = tpu.matmul %120, %0, %cst_49 {dimension_numbers = #tpu.dot_dimension_numbers<[1], [0], [0], [1], [0, 0, 1, 1], [], []>} : vector<8x16xf32>, vector<16x48xf32>, vector<8x48xf32> -> vector<8x48xf32>
    %168 = vector.broadcast %2 : vector<1x48xf32> to vector<8x48xf32>
    %169 = arith.addf %167, %168 : vector<8x48xf32>
    %170 = vector.extract_strided_slice %162 {offsets = [0, 0], sizes = [8, 16], strides = [1, 1]} : vector<8x48xf32> to vector<8x16xf32>
    %171 = vector.extract_strided_slice %169 {offsets = [0, 0], sizes = [8, 16], strides = [1, 1]} : vector<8x48xf32> to vector<8x16xf32>
    %172 = arith.addf %170, %171 : vector<8x16xf32>
    %173 = arith.negf %172 : vector<8x16xf32>
    %174 = math.exp %173 : vector<8x16xf32>
    %cst_50 = arith.constant 1.000000e+00 : f32
    %175 = vector.broadcast %cst_50 : f32 to vector<8x16xf32>
    %176 = arith.addf %175, %174 : vector<8x16xf32>
    %177 = arith.divf %175, %176 : vector<8x16xf32>
    %178 = vector.extract_strided_slice %162 {offsets = [0, 16], sizes = [8, 16], strides = [1, 1]} : vector<8x48xf32> to vector<8x16xf32>
    %179 = vector.extract_strided_slice %169 {offsets = [0, 16], sizes = [8, 16], strides = [1, 1]} : vector<8x48xf32> to vector<8x16xf32>
    %180 = arith.addf %178, %179 : vector<8x16xf32>
    %181 = arith.negf %180 : vector<8x16xf32>
    %182 = math.exp %181 : vector<8x16xf32>
    %cst_51 = arith.constant 1.000000e+00 : f32
    %183 = vector.broadcast %cst_51 : f32 to vector<8x16xf32>
    %184 = arith.addf %183, %182 : vector<8x16xf32>
    %185 = arith.divf %183, %184 : vector<8x16xf32>
    %186 = vector.extract_strided_slice %162 {offsets = [0, 32], sizes = [8, 16], strides = [1, 1]} : vector<8x48xf32> to vector<8x16xf32>
    %187 = vector.extract_strided_slice %169 {offsets = [0, 32], sizes = [8, 16], strides = [1, 1]} : vector<8x48xf32> to vector<8x16xf32>
    %188 = arith.mulf %177, %187 : vector<8x16xf32>
    %189 = arith.addf %186, %188 : vector<8x16xf32>
    %190 = math.tanh %189 : vector<8x16xf32>
    %cst_52 = arith.constant 1.000000e+00 : f32
    %191 = vector.broadcast %cst_52 : f32 to vector<8x16xf32>
    %192 = arith.subf %191, %185 : vector<8x16xf32>
    %193 = arith.mulf %192, %190 : vector<8x16xf32>
    %194 = arith.mulf %185, %120 : vector<8x16xf32>
    %195 = arith.addf %193, %194 : vector<8x16xf32>
    %cst_53 = arith.constant dense<0.000000e+00> : vector<8x48xf32>
    %196 = tpu.matmul %149, %1, %cst_53 {dimension_numbers = #tpu.dot_dimension_numbers<[1], [0], [0], [1], [0, 0, 1, 1], [], []>} : vector<8x16xf32>, vector<16x48xf32>, vector<8x48xf32> -> vector<8x48xf32>
    %197 = vector.broadcast %3 : vector<1x48xf32> to vector<8x48xf32>
    %198 = arith.addf %196, %197 : vector<8x48xf32>
    %199 = vector.extract_strided_slice %166 {offsets = [0, 0], sizes = [8, 16], strides = [1, 1]} : vector<8x48xf32> to vector<8x16xf32>
    %200 = vector.extract_strided_slice %198 {offsets = [0, 0], sizes = [8, 16], strides = [1, 1]} : vector<8x48xf32> to vector<8x16xf32>
    %201 = arith.addf %199, %200 : vector<8x16xf32>
    %202 = arith.negf %201 : vector<8x16xf32>
    %203 = math.exp %202 : vector<8x16xf32>
    %cst_54 = arith.constant 1.000000e+00 : f32
    %204 = vector.broadcast %cst_54 : f32 to vector<8x16xf32>
    %205 = arith.addf %204, %203 : vector<8x16xf32>
    %206 = arith.divf %204, %205 : vector<8x16xf32>
    %207 = vector.extract_strided_slice %166 {offsets = [0, 16], sizes = [8, 16], strides = [1, 1]} : vector<8x48xf32> to vector<8x16xf32>
    %208 = vector.extract_strided_slice %198 {offsets = [0, 16], sizes = [8, 16], strides = [1, 1]} : vector<8x48xf32> to vector<8x16xf32>
    %209 = arith.addf %207, %208 : vector<8x16xf32>
    %210 = arith.negf %209 : vector<8x16xf32>
    %211 = math.exp %210 : vector<8x16xf32>
    %cst_55 = arith.constant 1.000000e+00 : f32
    %212 = vector.broadcast %cst_55 : f32 to vector<8x16xf32>
    %213 = arith.addf %212, %211 : vector<8x16xf32>
    %214 = arith.divf %212, %213 : vector<8x16xf32>
    %215 = vector.extract_strided_slice %166 {offsets = [0, 32], sizes = [8, 16], strides = [1, 1]} : vector<8x48xf32> to vector<8x16xf32>
    %216 = vector.extract_strided_slice %198 {offsets = [0, 32], sizes = [8, 16], strides = [1, 1]} : vector<8x48xf32> to vector<8x16xf32>
    %217 = arith.mulf %206, %216 : vector<8x16xf32>
    %218 = arith.addf %215, %217 : vector<8x16xf32>
    %219 = math.tanh %218 : vector<8x16xf32>
    %cst_56 = arith.constant 1.000000e+00 : f32
    %220 = vector.broadcast %cst_56 : f32 to vector<8x16xf32>
    %221 = arith.subf %220, %214 : vector<8x16xf32>
    %222 = arith.mulf %221, %219 : vector<8x16xf32>
    %223 = arith.mulf %214, %149 : vector<8x16xf32>
    %224 = arith.addf %222, %223 : vector<8x16xf32>
    %225 = arith.index_cast %c2_i32 : i32 to index
    %c0_57 = arith.constant 0 : index
    %c0_58 = arith.constant 0 : index
    %226 = vector.load %arg12[%225, %c0_57, %c0_58] : memref<8x8x16xf32, #tpu.memory_space<vmem>>, vector<1x8x16xf32>
    %227 = vector.shape_cast %226 : vector<1x8x16xf32> to vector<8x16xf32>
    %228 = vector.shape_cast %195 : vector<8x16xf32> to vector<1x8x16xf32>
    tpu.vector_store %arg12[%225, %c0_57, %c0_58], %228 {strides = array<i32>} : memref<8x8x16xf32, #tpu.memory_space<vmem>>, vector<1x8x16xf32>,
    %229 = arith.index_cast %158 : i32 to index
    %c0_59 = arith.constant 0 : index
    %c0_60 = arith.constant 0 : index
    %230 = vector.load %arg13[%229, %c0_59, %c0_60] : memref<8x8x16xf32, #tpu.memory_space<vmem>>, vector<1x8x16xf32>
    %231 = vector.shape_cast %230 : vector<1x8x16xf32> to vector<8x16xf32>
    %232 = vector.shape_cast %224 : vector<8x16xf32> to vector<1x8x16xf32>
    tpu.vector_store %arg13[%229, %c0_59, %c0_60], %232 {strides = array<i32>} : memref<8x8x16xf32, #tpu.memory_space<vmem>>, vector<1x8x16xf32>,
    %c3_i32 = arith.constant 3 : i32
    %c7_i32_61 = arith.constant 7 : i32
    %233 = arith.subi %c7_i32_61, %c3_i32 : i32
    %234 = arith.index_cast %c3_i32 : i32 to index
    %c0_62 = arith.constant 0 : index
    %c0_63 = arith.constant 0 : index
    %235 = vector.load %arg1[%234, %c0_62, %c0_63] : memref<8x8x96xf32, #tpu.memory_space<vmem>>, vector<1x8x96xf32>
    %236 = vector.shape_cast %235 : vector<1x8x96xf32> to vector<8x96xf32>
    %237 = vector.extract_strided_slice %236 {offsets = [0, 0], sizes = [8, 48], strides = [1, 1]} : vector<8x96xf32> to vector<8x48xf32>
    %238 = arith.index_cast %233 : i32 to index
    %c0_64 = arith.constant 0 : index
    %c0_65 = arith.constant 0 : index
    %239 = vector.load %arg1[%238, %c0_64, %c0_65] : memref<8x8x96xf32, #tpu.memory_space<vmem>>, vector<1x8x96xf32>
    %240 = vector.shape_cast %239 : vector<1x8x96xf32> to vector<8x96xf32>
    %241 = vector.extract_strided_slice %240 {offsets = [0, 48], sizes = [8, 48], strides = [1, 1]} : vector<8x96xf32> to vector<8x48xf32>
    %cst_66 = arith.constant dense<0.000000e+00> : vector<8x48xf32>
    %242 = tpu.matmul %195, %0, %cst_66 {dimension_numbers = #tpu.dot_dimension_numbers<[1], [0], [0], [1], [0, 0, 1, 1], [], []>} : vector<8x16xf32>, vector<16x48xf32>, vector<8x48xf32> -> vector<8x48xf32>
    %243 = vector.broadcast %2 : vector<1x48xf32> to vector<8x48xf32>
    %244 = arith.addf %242, %243 : vector<8x48xf32>
    %245 = vector.extract_strided_slice %237 {offsets = [0, 0], sizes = [8, 16], strides = [1, 1]} : vector<8x48xf32> to vector<8x16xf32>
    %246 = vector.extract_strided_slice %244 {offsets = [0, 0], sizes = [8, 16], strides = [1, 1]} : vector<8x48xf32> to vector<8x16xf32>
    %247 = arith.addf %245, %246 : vector<8x16xf32>
    %248 = arith.negf %247 : vector<8x16xf32>
    %249 = math.exp %248 : vector<8x16xf32>
    %cst_67 = arith.constant 1.000000e+00 : f32
    %250 = vector.broadcast %cst_67 : f32 to vector<8x16xf32>
    %251 = arith.addf %250, %249 : vector<8x16xf32>
    %252 = arith.divf %250, %251 : vector<8x16xf32>
    %253 = vector.extract_strided_slice %237 {offsets = [0, 16], sizes = [8, 16], strides = [1, 1]} : vector<8x48xf32> to vector<8x16xf32>
    %254 = vector.extract_strided_slice %244 {offsets = [0, 16], sizes = [8, 16], strides = [1, 1]} : vector<8x48xf32> to vector<8x16xf32>
    %255 = arith.addf %253, %254 : vector<8x16xf32>
    %256 = arith.negf %255 : vector<8x16xf32>
    %257 = math.exp %256 : vector<8x16xf32>
    %cst_68 = arith.constant 1.000000e+00 : f32
    %258 = vector.broadcast %cst_68 : f32 to vector<8x16xf32>
    %259 = arith.addf %258, %257 : vector<8x16xf32>
    %260 = arith.divf %258, %259 : vector<8x16xf32>
    %261 = vector.extract_strided_slice %237 {offsets = [0, 32], sizes = [8, 16], strides = [1, 1]} : vector<8x48xf32> to vector<8x16xf32>
    %262 = vector.extract_strided_slice %244 {offsets = [0, 32], sizes = [8, 16], strides = [1, 1]} : vector<8x48xf32> to vector<8x16xf32>
    %263 = arith.mulf %252, %262 : vector<8x16xf32>
    %264 = arith.addf %261, %263 : vector<8x16xf32>
    %265 = math.tanh %264 : vector<8x16xf32>
    %cst_69 = arith.constant 1.000000e+00 : f32
    %266 = vector.broadcast %cst_69 : f32 to vector<8x16xf32>
    %267 = arith.subf %266, %260 : vector<8x16xf32>
    %268 = arith.mulf %267, %265 : vector<8x16xf32>
    %269 = arith.mulf %260, %195 : vector<8x16xf32>
    %270 = arith.addf %268, %269 : vector<8x16xf32>
    %cst_70 = arith.constant dense<0.000000e+00> : vector<8x48xf32>
    %271 = tpu.matmul %224, %1, %cst_70 {dimension_numbers = #tpu.dot_dimension_numbers<[1], [0], [0], [1], [0, 0, 1, 1], [], []>} : vector<8x16xf32>, vector<16x48xf32>, vector<8x48xf32> -> vector<8x48xf32>
    %272 = vector.broadcast %3 : vector<1x48xf32> to vector<8x48xf32>
    %273 = arith.addf %271, %272 : vector<8x48xf32>
    %274 = vector.extract_strided_slice %241 {offsets = [0, 0], sizes = [8, 16], strides = [1, 1]} : vector<8x48xf32> to vector<8x16xf32>
    %275 = vector.extract_strided_slice %273 {offsets = [0, 0], sizes = [8, 16], strides = [1, 1]} : vector<8x48xf32> to vector<8x16xf32>
    %276 = arith.addf %274, %275 : vector<8x16xf32>
    %277 = arith.negf %276 : vector<8x16xf32>
    %278 = math.exp %277 : vector<8x16xf32>
    %cst_71 = arith.constant 1.000000e+00 : f32
    %279 = vector.broadcast %cst_71 : f32 to vector<8x16xf32>
    %280 = arith.addf %279, %278 : vector<8x16xf32>
    %281 = arith.divf %279, %280 : vector<8x16xf32>
    %282 = vector.extract_strided_slice %241 {offsets = [0, 16], sizes = [8, 16], strides = [1, 1]} : vector<8x48xf32> to vector<8x16xf32>
    %283 = vector.extract_strided_slice %273 {offsets = [0, 16], sizes = [8, 16], strides = [1, 1]} : vector<8x48xf32> to vector<8x16xf32>
    %284 = arith.addf %282, %283 : vector<8x16xf32>
    %285 = arith.negf %284 : vector<8x16xf32>
    %286 = math.exp %285 : vector<8x16xf32>
    %cst_72 = arith.constant 1.000000e+00 : f32
    %287 = vector.broadcast %cst_72 : f32 to vector<8x16xf32>
    %288 = arith.addf %287, %286 : vector<8x16xf32>
    %289 = arith.divf %287, %288 : vector<8x16xf32>
    %290 = vector.extract_strided_slice %241 {offsets = [0, 32], sizes = [8, 16], strides = [1, 1]} : vector<8x48xf32> to vector<8x16xf32>
    %291 = vector.extract_strided_slice %273 {offsets = [0, 32], sizes = [8, 16], strides = [1, 1]} : vector<8x48xf32> to vector<8x16xf32>
    %292 = arith.mulf %281, %291 : vector<8x16xf32>
    %293 = arith.addf %290, %292 : vector<8x16xf32>
    %294 = math.tanh %293 : vector<8x16xf32>
    %cst_73 = arith.constant 1.000000e+00 : f32
    %295 = vector.broadcast %cst_73 : f32 to vector<8x16xf32>
    %296 = arith.subf %295, %289 : vector<8x16xf32>
    %297 = arith.mulf %296, %294 : vector<8x16xf32>
    %298 = arith.mulf %289, %224 : vector<8x16xf32>
    %299 = arith.addf %297, %298 : vector<8x16xf32>
    %300 = arith.index_cast %c3_i32 : i32 to index
    %c0_74 = arith.constant 0 : index
    %c0_75 = arith.constant 0 : index
    %301 = vector.load %arg12[%300, %c0_74, %c0_75] : memref<8x8x16xf32, #tpu.memory_space<vmem>>, vector<1x8x16xf32>
    %302 = vector.shape_cast %301 : vector<1x8x16xf32> to vector<8x16xf32>
    %303 = vector.shape_cast %270 : vector<8x16xf32> to vector<1x8x16xf32>
    tpu.vector_store %arg12[%300, %c0_74, %c0_75], %303 {strides = array<i32>} : memref<8x8x16xf32, #tpu.memory_space<vmem>>, vector<1x8x16xf32>,
    %304 = arith.index_cast %233 : i32 to index
    %c0_76 = arith.constant 0 : index
    %c0_77 = arith.constant 0 : index
    %305 = vector.load %arg13[%304, %c0_76, %c0_77] : memref<8x8x16xf32, #tpu.memory_space<vmem>>, vector<1x8x16xf32>
    %306 = vector.shape_cast %305 : vector<1x8x16xf32> to vector<8x16xf32>
    %307 = vector.shape_cast %299 : vector<8x16xf32> to vector<1x8x16xf32>
    tpu.vector_store %arg13[%304, %c0_76, %c0_77], %307 {strides = array<i32>} : memref<8x8x16xf32, #tpu.memory_space<vmem>>, vector<1x8x16xf32>,
    %c4_i32 = arith.constant 4 : i32
    %c7_i32_78 = arith.constant 7 : i32
    %308 = arith.subi %c7_i32_78, %c4_i32 : i32
    %309 = arith.index_cast %c4_i32 : i32 to index
    %c0_79 = arith.constant 0 : index
    %c0_80 = arith.constant 0 : index
    %310 = vector.load %arg1[%309, %c0_79, %c0_80] : memref<8x8x96xf32, #tpu.memory_space<vmem>>, vector<1x8x96xf32>
    %311 = vector.shape_cast %310 : vector<1x8x96xf32> to vector<8x96xf32>
    %312 = vector.extract_strided_slice %311 {offsets = [0, 0], sizes = [8, 48], strides = [1, 1]} : vector<8x96xf32> to vector<8x48xf32>
    %313 = arith.index_cast %308 : i32 to index
    %c0_81 = arith.constant 0 : index
    %c0_82 = arith.constant 0 : index
    %314 = vector.load %arg1[%313, %c0_81, %c0_82] : memref<8x8x96xf32, #tpu.memory_space<vmem>>, vector<1x8x96xf32>
    %315 = vector.shape_cast %314 : vector<1x8x96xf32> to vector<8x96xf32>
    %316 = vector.extract_strided_slice %315 {offsets = [0, 48], sizes = [8, 48], strides = [1, 1]} : vector<8x96xf32> to vector<8x48xf32>
    %cst_83 = arith.constant dense<0.000000e+00> : vector<8x48xf32>
    %317 = tpu.matmul %270, %0, %cst_83 {dimension_numbers = #tpu.dot_dimension_numbers<[1], [0], [0], [1], [0, 0, 1, 1], [], []>} : vector<8x16xf32>, vector<16x48xf32>, vector<8x48xf32> -> vector<8x48xf32>
    %318 = vector.broadcast %2 : vector<1x48xf32> to vector<8x48xf32>
    %319 = arith.addf %317, %318 : vector<8x48xf32>
    %320 = vector.extract_strided_slice %312 {offsets = [0, 0], sizes = [8, 16], strides = [1, 1]} : vector<8x48xf32> to vector<8x16xf32>
    %321 = vector.extract_strided_slice %319 {offsets = [0, 0], sizes = [8, 16], strides = [1, 1]} : vector<8x48xf32> to vector<8x16xf32>
    %322 = arith.addf %320, %321 : vector<8x16xf32>
    %323 = arith.negf %322 : vector<8x16xf32>
    %324 = math.exp %323 : vector<8x16xf32>
    %cst_84 = arith.constant 1.000000e+00 : f32
    %325 = vector.broadcast %cst_84 : f32 to vector<8x16xf32>
    %326 = arith.addf %325, %324 : vector<8x16xf32>
    %327 = arith.divf %325, %326 : vector<8x16xf32>
    %328 = vector.extract_strided_slice %312 {offsets = [0, 16], sizes = [8, 16], strides = [1, 1]} : vector<8x48xf32> to vector<8x16xf32>
    %329 = vector.extract_strided_slice %319 {offsets = [0, 16], sizes = [8, 16], strides = [1, 1]} : vector<8x48xf32> to vector<8x16xf32>
    %330 = arith.addf %328, %329 : vector<8x16xf32>
    %331 = arith.negf %330 : vector<8x16xf32>
    %332 = math.exp %331 : vector<8x16xf32>
    %cst_85 = arith.constant 1.000000e+00 : f32
    %333 = vector.broadcast %cst_85 : f32 to vector<8x16xf32>
    %334 = arith.addf %333, %332 : vector<8x16xf32>
    %335 = arith.divf %333, %334 : vector<8x16xf32>
    %336 = vector.extract_strided_slice %312 {offsets = [0, 32], sizes = [8, 16], strides = [1, 1]} : vector<8x48xf32> to vector<8x16xf32>
    %337 = vector.extract_strided_slice %319 {offsets = [0, 32], sizes = [8, 16], strides = [1, 1]} : vector<8x48xf32> to vector<8x16xf32>
    %338 = arith.mulf %327, %337 : vector<8x16xf32>
    %339 = arith.addf %336, %338 : vector<8x16xf32>
    %340 = math.tanh %339 : vector<8x16xf32>
    %cst_86 = arith.constant 1.000000e+00 : f32
    %341 = vector.broadcast %cst_86 : f32 to vector<8x16xf32>
    %342 = arith.subf %341, %335 : vector<8x16xf32>
    %343 = arith.mulf %342, %340 : vector<8x16xf32>
    %344 = arith.mulf %335, %270 : vector<8x16xf32>
    %345 = arith.addf %343, %344 : vector<8x16xf32>
    %cst_87 = arith.constant dense<0.000000e+00> : vector<8x48xf32>
    %346 = tpu.matmul %299, %1, %cst_87 {dimension_numbers = #tpu.dot_dimension_numbers<[1], [0], [0], [1], [0, 0, 1, 1], [], []>} : vector<8x16xf32>, vector<16x48xf32>, vector<8x48xf32> -> vector<8x48xf32>
    %347 = vector.broadcast %3 : vector<1x48xf32> to vector<8x48xf32>
    %348 = arith.addf %346, %347 : vector<8x48xf32>
    %349 = vector.extract_strided_slice %316 {offsets = [0, 0], sizes = [8, 16], strides = [1, 1]} : vector<8x48xf32> to vector<8x16xf32>
    %350 = vector.extract_strided_slice %348 {offsets = [0, 0], sizes = [8, 16], strides = [1, 1]} : vector<8x48xf32> to vector<8x16xf32>
    %351 = arith.addf %349, %350 : vector<8x16xf32>
    %352 = arith.negf %351 : vector<8x16xf32>
    %353 = math.exp %352 : vector<8x16xf32>
    %cst_88 = arith.constant 1.000000e+00 : f32
    %354 = vector.broadcast %cst_88 : f32 to vector<8x16xf32>
    %355 = arith.addf %354, %353 : vector<8x16xf32>
    %356 = arith.divf %354, %355 : vector<8x16xf32>
    %357 = vector.extract_strided_slice %316 {offsets = [0, 16], sizes = [8, 16], strides = [1, 1]} : vector<8x48xf32> to vector<8x16xf32>
    %358 = vector.extract_strided_slice %348 {offsets = [0, 16], sizes = [8, 16], strides = [1, 1]} : vector<8x48xf32> to vector<8x16xf32>
    %359 = arith.addf %357, %358 : vector<8x16xf32>
    %360 = arith.negf %359 : vector<8x16xf32>
    %361 = math.exp %360 : vector<8x16xf32>
    %cst_89 = arith.constant 1.000000e+00 : f32
    %362 = vector.broadcast %cst_89 : f32 to vector<8x16xf32>
    %363 = arith.addf %362, %361 : vector<8x16xf32>
    %364 = arith.divf %362, %363 : vector<8x16xf32>
    %365 = vector.extract_strided_slice %316 {offsets = [0, 32], sizes = [8, 16], strides = [1, 1]} : vector<8x48xf32> to vector<8x16xf32>
    %366 = vector.extract_strided_slice %348 {offsets = [0, 32], sizes = [8, 16], strides = [1, 1]} : vector<8x48xf32> to vector<8x16xf32>
    %367 = arith.mulf %356, %366 : vector<8x16xf32>
    %368 = arith.addf %365, %367 : vector<8x16xf32>
    %369 = math.tanh %368 : vector<8x16xf32>
    %cst_90 = arith.constant 1.000000e+00 : f32
    %370 = vector.broadcast %cst_90 : f32 to vector<8x16xf32>
    %371 = arith.subf %370, %364 : vector<8x16xf32>
    %372 = arith.mulf %371, %369 : vector<8x16xf32>
    %373 = arith.mulf %364, %299 : vector<8x16xf32>
    %374 = arith.addf %372, %373 : vector<8x16xf32>
    %375 = arith.index_cast %c4_i32 : i32 to index
    %c0_91 = arith.constant 0 : index
    %c0_92 = arith.constant 0 : index
    %376 = vector.load %arg12[%375, %c0_91, %c0_92] : memref<8x8x16xf32, #tpu.memory_space<vmem>>, vector<1x8x16xf32>
    %377 = vector.shape_cast %376 : vector<1x8x16xf32> to vector<8x16xf32>
    %378 = vector.shape_cast %345 : vector<8x16xf32> to vector<1x8x16xf32>
    tpu.vector_store %arg12[%375, %c0_91, %c0_92], %378 {strides = array<i32>} : memref<8x8x16xf32, #tpu.memory_space<vmem>>, vector<1x8x16xf32>,
    %379 = arith.index_cast %308 : i32 to index
    %c0_93 = arith.constant 0 : index
    %c0_94 = arith.constant 0 : index
    %380 = vector.load %arg13[%379, %c0_93, %c0_94] : memref<8x8x16xf32, #tpu.memory_space<vmem>>, vector<1x8x16xf32>
    %381 = vector.shape_cast %380 : vector<1x8x16xf32> to vector<8x16xf32>
    %382 = vector.shape_cast %374 : vector<8x16xf32> to vector<1x8x16xf32>
    tpu.vector_store %arg13[%379, %c0_93, %c0_94], %382 {strides = array<i32>} : memref<8x8x16xf32, #tpu.memory_space<vmem>>, vector<1x8x16xf32>,
    %c5_i32 = arith.constant 5 : i32
    %c7_i32_95 = arith.constant 7 : i32
    %383 = arith.subi %c7_i32_95, %c5_i32 : i32
    %384 = arith.index_cast %c5_i32 : i32 to index
    %c0_96 = arith.constant 0 : index
    %c0_97 = arith.constant 0 : index
    %385 = vector.load %arg1[%384, %c0_96, %c0_97] : memref<8x8x96xf32, #tpu.memory_space<vmem>>, vector<1x8x96xf32>
    %386 = vector.shape_cast %385 : vector<1x8x96xf32> to vector<8x96xf32>
    %387 = vector.extract_strided_slice %386 {offsets = [0, 0], sizes = [8, 48], strides = [1, 1]} : vector<8x96xf32> to vector<8x48xf32>
    %388 = arith.index_cast %383 : i32 to index
    %c0_98 = arith.constant 0 : index
    %c0_99 = arith.constant 0 : index
    %389 = vector.load %arg1[%388, %c0_98, %c0_99] : memref<8x8x96xf32, #tpu.memory_space<vmem>>, vector<1x8x96xf32>
    %390 = vector.shape_cast %389 : vector<1x8x96xf32> to vector<8x96xf32>
    %391 = vector.extract_strided_slice %390 {offsets = [0, 48], sizes = [8, 48], strides = [1, 1]} : vector<8x96xf32> to vector<8x48xf32>
    %cst_100 = arith.constant dense<0.000000e+00> : vector<8x48xf32>
    %392 = tpu.matmul %345, %0, %cst_100 {dimension_numbers = #tpu.dot_dimension_numbers<[1], [0], [0], [1], [0, 0, 1, 1], [], []>} : vector<8x16xf32>, vector<16x48xf32>, vector<8x48xf32> -> vector<8x48xf32>
    %393 = vector.broadcast %2 : vector<1x48xf32> to vector<8x48xf32>
    %394 = arith.addf %392, %393 : vector<8x48xf32>
    %395 = vector.extract_strided_slice %387 {offsets = [0, 0], sizes = [8, 16], strides = [1, 1]} : vector<8x48xf32> to vector<8x16xf32>
    %396 = vector.extract_strided_slice %394 {offsets = [0, 0], sizes = [8, 16], strides = [1, 1]} : vector<8x48xf32> to vector<8x16xf32>
    %397 = arith.addf %395, %396 : vector<8x16xf32>
    %398 = arith.negf %397 : vector<8x16xf32>
    %399 = math.exp %398 : vector<8x16xf32>
    %cst_101 = arith.constant 1.000000e+00 : f32
    %400 = vector.broadcast %cst_101 : f32 to vector<8x16xf32>
    %401 = arith.addf %400, %399 : vector<8x16xf32>
    %402 = arith.divf %400, %401 : vector<8x16xf32>
    %403 = vector.extract_strided_slice %387 {offsets = [0, 16], sizes = [8, 16], strides = [1, 1]} : vector<8x48xf32> to vector<8x16xf32>
    %404 = vector.extract_strided_slice %394 {offsets = [0, 16], sizes = [8, 16], strides = [1, 1]} : vector<8x48xf32> to vector<8x16xf32>
    %405 = arith.addf %403, %404 : vector<8x16xf32>
    %406 = arith.negf %405 : vector<8x16xf32>
    %407 = math.exp %406 : vector<8x16xf32>
    %cst_102 = arith.constant 1.000000e+00 : f32
    %408 = vector.broadcast %cst_102 : f32 to vector<8x16xf32>
    %409 = arith.addf %408, %407 : vector<8x16xf32>
    %410 = arith.divf %408, %409 : vector<8x16xf32>
    %411 = vector.extract_strided_slice %387 {offsets = [0, 32], sizes = [8, 16], strides = [1, 1]} : vector<8x48xf32> to vector<8x16xf32>
    %412 = vector.extract_strided_slice %394 {offsets = [0, 32], sizes = [8, 16], strides = [1, 1]} : vector<8x48xf32> to vector<8x16xf32>
    %413 = arith.mulf %402, %412 : vector<8x16xf32>
    %414 = arith.addf %411, %413 : vector<8x16xf32>
    %415 = math.tanh %414 : vector<8x16xf32>
    %cst_103 = arith.constant 1.000000e+00 : f32
    %416 = vector.broadcast %cst_103 : f32 to vector<8x16xf32>
    %417 = arith.subf %416, %410 : vector<8x16xf32>
    %418 = arith.mulf %417, %415 : vector<8x16xf32>
    %419 = arith.mulf %410, %345 : vector<8x16xf32>
    %420 = arith.addf %418, %419 : vector<8x16xf32>
    %cst_104 = arith.constant dense<0.000000e+00> : vector<8x48xf32>
    %421 = tpu.matmul %374, %1, %cst_104 {dimension_numbers = #tpu.dot_dimension_numbers<[1], [0], [0], [1], [0, 0, 1, 1], [], []>} : vector<8x16xf32>, vector<16x48xf32>, vector<8x48xf32> -> vector<8x48xf32>
    %422 = vector.broadcast %3 : vector<1x48xf32> to vector<8x48xf32>
    %423 = arith.addf %421, %422 : vector<8x48xf32>
    %424 = vector.extract_strided_slice %391 {offsets = [0, 0], sizes = [8, 16], strides = [1, 1]} : vector<8x48xf32> to vector<8x16xf32>
    %425 = vector.extract_strided_slice %423 {offsets = [0, 0], sizes = [8, 16], strides = [1, 1]} : vector<8x48xf32> to vector<8x16xf32>
    %426 = arith.addf %424, %425 : vector<8x16xf32>
    %427 = arith.negf %426 : vector<8x16xf32>
    %428 = math.exp %427 : vector<8x16xf32>
    %cst_105 = arith.constant 1.000000e+00 : f32
    %429 = vector.broadcast %cst_105 : f32 to vector<8x16xf32>
    %430 = arith.addf %429, %428 : vector<8x16xf32>
    %431 = arith.divf %429, %430 : vector<8x16xf32>
    %432 = vector.extract_strided_slice %391 {offsets = [0, 16], sizes = [8, 16], strides = [1, 1]} : vector<8x48xf32> to vector<8x16xf32>
    %433 = vector.extract_strided_slice %423 {offsets = [0, 16], sizes = [8, 16], strides = [1, 1]} : vector<8x48xf32> to vector<8x16xf32>
    %434 = arith.addf %432, %433 : vector<8x16xf32>
    %435 = arith.negf %434 : vector<8x16xf32>
    %436 = math.exp %435 : vector<8x16xf32>
    %cst_106 = arith.constant 1.000000e+00 : f32
    %437 = vector.broadcast %cst_106 : f32 to vector<8x16xf32>
    %438 = arith.addf %437, %436 : vector<8x16xf32>
    %439 = arith.divf %437, %438 : vector<8x16xf32>
    %440 = vector.extract_strided_slice %391 {offsets = [0, 32], sizes = [8, 16], strides = [1, 1]} : vector<8x48xf32> to vector<8x16xf32>
    %441 = vector.extract_strided_slice %423 {offsets = [0, 32], sizes = [8, 16], strides = [1, 1]} : vector<8x48xf32> to vector<8x16xf32>
    %442 = arith.mulf %431, %441 : vector<8x16xf32>
    %443 = arith.addf %440, %442 : vector<8x16xf32>
    %444 = math.tanh %443 : vector<8x16xf32>
    %cst_107 = arith.constant 1.000000e+00 : f32
    %445 = vector.broadcast %cst_107 : f32 to vector<8x16xf32>
    %446 = arith.subf %445, %439 : vector<8x16xf32>
    %447 = arith.mulf %446, %444 : vector<8x16xf32>
    %448 = arith.mulf %439, %374 : vector<8x16xf32>
    %449 = arith.addf %447, %448 : vector<8x16xf32>
    %450 = arith.index_cast %c5_i32 : i32 to index
    %c0_108 = arith.constant 0 : index
    %c0_109 = arith.constant 0 : index
    %451 = vector.load %arg12[%450, %c0_108, %c0_109] : memref<8x8x16xf32, #tpu.memory_space<vmem>>, vector<1x8x16xf32>
    %452 = vector.shape_cast %451 : vector<1x8x16xf32> to vector<8x16xf32>
    %453 = vector.shape_cast %420 : vector<8x16xf32> to vector<1x8x16xf32>
    tpu.vector_store %arg12[%450, %c0_108, %c0_109], %453 {strides = array<i32>} : memref<8x8x16xf32, #tpu.memory_space<vmem>>, vector<1x8x16xf32>,
    %454 = arith.index_cast %383 : i32 to index
    %c0_110 = arith.constant 0 : index
    %c0_111 = arith.constant 0 : index
    %455 = vector.load %arg13[%454, %c0_110, %c0_111] : memref<8x8x16xf32, #tpu.memory_space<vmem>>, vector<1x8x16xf32>
    %456 = vector.shape_cast %455 : vector<1x8x16xf32> to vector<8x16xf32>
    %457 = vector.shape_cast %449 : vector<8x16xf32> to vector<1x8x16xf32>
    tpu.vector_store %arg13[%454, %c0_110, %c0_111], %457 {strides = array<i32>} : memref<8x8x16xf32, #tpu.memory_space<vmem>>, vector<1x8x16xf32>,
    %c6_i32 = arith.constant 6 : i32
    %c7_i32_112 = arith.constant 7 : i32
    %458 = arith.subi %c7_i32_112, %c6_i32 : i32
    %459 = arith.index_cast %c6_i32 : i32 to index
    %c0_113 = arith.constant 0 : index
    %c0_114 = arith.constant 0 : index
    %460 = vector.load %arg1[%459, %c0_113, %c0_114] : memref<8x8x96xf32, #tpu.memory_space<vmem>>, vector<1x8x96xf32>
    %461 = vector.shape_cast %460 : vector<1x8x96xf32> to vector<8x96xf32>
    %462 = vector.extract_strided_slice %461 {offsets = [0, 0], sizes = [8, 48], strides = [1, 1]} : vector<8x96xf32> to vector<8x48xf32>
    %463 = arith.index_cast %458 : i32 to index
    %c0_115 = arith.constant 0 : index
    %c0_116 = arith.constant 0 : index
    %464 = vector.load %arg1[%463, %c0_115, %c0_116] : memref<8x8x96xf32, #tpu.memory_space<vmem>>, vector<1x8x96xf32>
    %465 = vector.shape_cast %464 : vector<1x8x96xf32> to vector<8x96xf32>
    %466 = vector.extract_strided_slice %465 {offsets = [0, 48], sizes = [8, 48], strides = [1, 1]} : vector<8x96xf32> to vector<8x48xf32>
    %cst_117 = arith.constant dense<0.000000e+00> : vector<8x48xf32>
    %467 = tpu.matmul %420, %0, %cst_117 {dimension_numbers = #tpu.dot_dimension_numbers<[1], [0], [0], [1], [0, 0, 1, 1], [], []>} : vector<8x16xf32>, vector<16x48xf32>, vector<8x48xf32> -> vector<8x48xf32>
    %468 = vector.broadcast %2 : vector<1x48xf32> to vector<8x48xf32>
    %469 = arith.addf %467, %468 : vector<8x48xf32>
    %470 = vector.extract_strided_slice %462 {offsets = [0, 0], sizes = [8, 16], strides = [1, 1]} : vector<8x48xf32> to vector<8x16xf32>
    %471 = vector.extract_strided_slice %469 {offsets = [0, 0], sizes = [8, 16], strides = [1, 1]} : vector<8x48xf32> to vector<8x16xf32>
    %472 = arith.addf %470, %471 : vector<8x16xf32>
    %473 = arith.negf %472 : vector<8x16xf32>
    %474 = math.exp %473 : vector<8x16xf32>
    %cst_118 = arith.constant 1.000000e+00 : f32
    %475 = vector.broadcast %cst_118 : f32 to vector<8x16xf32>
    %476 = arith.addf %475, %474 : vector<8x16xf32>
    %477 = arith.divf %475, %476 : vector<8x16xf32>
    %478 = vector.extract_strided_slice %462 {offsets = [0, 16], sizes = [8, 16], strides = [1, 1]} : vector<8x48xf32> to vector<8x16xf32>
    %479 = vector.extract_strided_slice %469 {offsets = [0, 16], sizes = [8, 16], strides = [1, 1]} : vector<8x48xf32> to vector<8x16xf32>
    %480 = arith.addf %478, %479 : vector<8x16xf32>
    %481 = arith.negf %480 : vector<8x16xf32>
    %482 = math.exp %481 : vector<8x16xf32>
    %cst_119 = arith.constant 1.000000e+00 : f32
    %483 = vector.broadcast %cst_119 : f32 to vector<8x16xf32>
    %484 = arith.addf %483, %482 : vector<8x16xf32>
    %485 = arith.divf %483, %484 : vector<8x16xf32>
    %486 = vector.extract_strided_slice %462 {offsets = [0, 32], sizes = [8, 16], strides = [1, 1]} : vector<8x48xf32> to vector<8x16xf32>
    %487 = vector.extract_strided_slice %469 {offsets = [0, 32], sizes = [8, 16], strides = [1, 1]} : vector<8x48xf32> to vector<8x16xf32>
    %488 = arith.mulf %477, %487 : vector<8x16xf32>
    %489 = arith.addf %486, %488 : vector<8x16xf32>
    %490 = math.tanh %489 : vector<8x16xf32>
    %cst_120 = arith.constant 1.000000e+00 : f32
    %491 = vector.broadcast %cst_120 : f32 to vector<8x16xf32>
    %492 = arith.subf %491, %485 : vector<8x16xf32>
    %493 = arith.mulf %492, %490 : vector<8x16xf32>
    %494 = arith.mulf %485, %420 : vector<8x16xf32>
    %495 = arith.addf %493, %494 : vector<8x16xf32>
    %cst_121 = arith.constant dense<0.000000e+00> : vector<8x48xf32>
    %496 = tpu.matmul %449, %1, %cst_121 {dimension_numbers = #tpu.dot_dimension_numbers<[1], [0], [0], [1], [0, 0, 1, 1], [], []>} : vector<8x16xf32>, vector<16x48xf32>, vector<8x48xf32> -> vector<8x48xf32>
    %497 = vector.broadcast %3 : vector<1x48xf32> to vector<8x48xf32>
    %498 = arith.addf %496, %497 : vector<8x48xf32>
    %499 = vector.extract_strided_slice %466 {offsets = [0, 0], sizes = [8, 16], strides = [1, 1]} : vector<8x48xf32> to vector<8x16xf32>
    %500 = vector.extract_strided_slice %498 {offsets = [0, 0], sizes = [8, 16], strides = [1, 1]} : vector<8x48xf32> to vector<8x16xf32>
    %501 = arith.addf %499, %500 : vector<8x16xf32>
    %502 = arith.negf %501 : vector<8x16xf32>
    %503 = math.exp %502 : vector<8x16xf32>
    %cst_122 = arith.constant 1.000000e+00 : f32
    %504 = vector.broadcast %cst_122 : f32 to vector<8x16xf32>
    %505 = arith.addf %504, %503 : vector<8x16xf32>
    %506 = arith.divf %504, %505 : vector<8x16xf32>
    %507 = vector.extract_strided_slice %466 {offsets = [0, 16], sizes = [8, 16], strides = [1, 1]} : vector<8x48xf32> to vector<8x16xf32>
    %508 = vector.extract_strided_slice %498 {offsets = [0, 16], sizes = [8, 16], strides = [1, 1]} : vector<8x48xf32> to vector<8x16xf32>
    %509 = arith.addf %507, %508 : vector<8x16xf32>
    %510 = arith.negf %509 : vector<8x16xf32>
    %511 = math.exp %510 : vector<8x16xf32>
    %cst_123 = arith.constant 1.000000e+00 : f32
    %512 = vector.broadcast %cst_123 : f32 to vector<8x16xf32>
    %513 = arith.addf %512, %511 : vector<8x16xf32>
    %514 = arith.divf %512, %513 : vector<8x16xf32>
    %515 = vector.extract_strided_slice %466 {offsets = [0, 32], sizes = [8, 16], strides = [1, 1]} : vector<8x48xf32> to vector<8x16xf32>
    %516 = vector.extract_strided_slice %498 {offsets = [0, 32], sizes = [8, 16], strides = [1, 1]} : vector<8x48xf32> to vector<8x16xf32>
    %517 = arith.mulf %506, %516 : vector<8x16xf32>
    %518 = arith.addf %515, %517 : vector<8x16xf32>
    %519 = math.tanh %518 : vector<8x16xf32>
    %cst_124 = arith.constant 1.000000e+00 : f32
    %520 = vector.broadcast %cst_124 : f32 to vector<8x16xf32>
    %521 = arith.subf %520, %514 : vector<8x16xf32>
    %522 = arith.mulf %521, %519 : vector<8x16xf32>
    %523 = arith.mulf %514, %449 : vector<8x16xf32>
    %524 = arith.addf %522, %523 : vector<8x16xf32>
    %525 = arith.index_cast %c6_i32 : i32 to index
    %c0_125 = arith.constant 0 : index
    %c0_126 = arith.constant 0 : index
    %526 = vector.load %arg12[%525, %c0_125, %c0_126] : memref<8x8x16xf32, #tpu.memory_space<vmem>>, vector<1x8x16xf32>
    %527 = vector.shape_cast %526 : vector<1x8x16xf32> to vector<8x16xf32>
    %528 = vector.shape_cast %495 : vector<8x16xf32> to vector<1x8x16xf32>
    tpu.vector_store %arg12[%525, %c0_125, %c0_126], %528 {strides = array<i32>} : memref<8x8x16xf32, #tpu.memory_space<vmem>>, vector<1x8x16xf32>,
    %529 = arith.index_cast %458 : i32 to index
    %c0_127 = arith.constant 0 : index
    %c0_128 = arith.constant 0 : index
    %530 = vector.load %arg13[%529, %c0_127, %c0_128] : memref<8x8x16xf32, #tpu.memory_space<vmem>>, vector<1x8x16xf32>
    %531 = vector.shape_cast %530 : vector<1x8x16xf32> to vector<8x16xf32>
    %532 = vector.shape_cast %524 : vector<8x16xf32> to vector<1x8x16xf32>
    tpu.vector_store %arg13[%529, %c0_127, %c0_128], %532 {strides = array<i32>} : memref<8x8x16xf32, #tpu.memory_space<vmem>>, vector<1x8x16xf32>,
    %c7_i32_129 = arith.constant 7 : i32
    %c7_i32_130 = arith.constant 7 : i32
    %533 = arith.subi %c7_i32_130, %c7_i32_129 : i32
    %534 = arith.index_cast %c7_i32_129 : i32 to index
    %c0_131 = arith.constant 0 : index
    %c0_132 = arith.constant 0 : index
    %535 = vector.load %arg1[%534, %c0_131, %c0_132] : memref<8x8x96xf32, #tpu.memory_space<vmem>>, vector<1x8x96xf32>
    %536 = vector.shape_cast %535 : vector<1x8x96xf32> to vector<8x96xf32>
    %537 = vector.extract_strided_slice %536 {offsets = [0, 0], sizes = [8, 48], strides = [1, 1]} : vector<8x96xf32> to vector<8x48xf32>
    %538 = arith.index_cast %533 : i32 to index
    %c0_133 = arith.constant 0 : index
    %c0_134 = arith.constant 0 : index
    %539 = vector.load %arg1[%538, %c0_133, %c0_134] : memref<8x8x96xf32, #tpu.memory_space<vmem>>, vector<1x8x96xf32>
    %540 = vector.shape_cast %539 : vector<1x8x96xf32> to vector<8x96xf32>
    %541 = vector.extract_strided_slice %540 {offsets = [0, 48], sizes = [8, 48], strides = [1, 1]} : vector<8x96xf32> to vector<8x48xf32>
    %cst_135 = arith.constant dense<0.000000e+00> : vector<8x48xf32>
    %542 = tpu.matmul %495, %0, %cst_135 {dimension_numbers = #tpu.dot_dimension_numbers<[1], [0], [0], [1], [0, 0, 1, 1], [], []>} : vector<8x16xf32>, vector<16x48xf32>, vector<8x48xf32> -> vector<8x48xf32>
    %543 = vector.broadcast %2 : vector<1x48xf32> to vector<8x48xf32>
    %544 = arith.addf %542, %543 : vector<8x48xf32>
    %545 = vector.extract_strided_slice %537 {offsets = [0, 0], sizes = [8, 16], strides = [1, 1]} : vector<8x48xf32> to vector<8x16xf32>
    %546 = vector.extract_strided_slice %544 {offsets = [0, 0], sizes = [8, 16], strides = [1, 1]} : vector<8x48xf32> to vector<8x16xf32>
    %547 = arith.addf %545, %546 : vector<8x16xf32>
    %548 = arith.negf %547 : vector<8x16xf32>
    %549 = math.exp %548 : vector<8x16xf32>
    %cst_136 = arith.constant 1.000000e+00 : f32
    %550 = vector.broadcast %cst_136 : f32 to vector<8x16xf32>
    %551 = arith.addf %550, %549 : vector<8x16xf32>
    %552 = arith.divf %550, %551 : vector<8x16xf32>
    %553 = vector.extract_strided_slice %537 {offsets = [0, 16], sizes = [8, 16], strides = [1, 1]} : vector<8x48xf32> to vector<8x16xf32>
    %554 = vector.extract_strided_slice %544 {offsets = [0, 16], sizes = [8, 16], strides = [1, 1]} : vector<8x48xf32> to vector<8x16xf32>
    %555 = arith.addf %553, %554 : vector<8x16xf32>
    %556 = arith.negf %555 : vector<8x16xf32>
    %557 = math.exp %556 : vector<8x16xf32>
    %cst_137 = arith.constant 1.000000e+00 : f32
    %558 = vector.broadcast %cst_137 : f32 to vector<8x16xf32>
    %559 = arith.addf %558, %557 : vector<8x16xf32>
    %560 = arith.divf %558, %559 : vector<8x16xf32>
    %561 = vector.extract_strided_slice %537 {offsets = [0, 32], sizes = [8, 16], strides = [1, 1]} : vector<8x48xf32> to vector<8x16xf32>
    %562 = vector.extract_strided_slice %544 {offsets = [0, 32], sizes = [8, 16], strides = [1, 1]} : vector<8x48xf32> to vector<8x16xf32>
    %563 = arith.mulf %552, %562 : vector<8x16xf32>
    %564 = arith.addf %561, %563 : vector<8x16xf32>
    %565 = math.tanh %564 : vector<8x16xf32>
    %cst_138 = arith.constant 1.000000e+00 : f32
    %566 = vector.broadcast %cst_138 : f32 to vector<8x16xf32>
    %567 = arith.subf %566, %560 : vector<8x16xf32>
    %568 = arith.mulf %567, %565 : vector<8x16xf32>
    %569 = arith.mulf %560, %495 : vector<8x16xf32>
    %570 = arith.addf %568, %569 : vector<8x16xf32>
    %cst_139 = arith.constant dense<0.000000e+00> : vector<8x48xf32>
    %571 = tpu.matmul %524, %1, %cst_139 {dimension_numbers = #tpu.dot_dimension_numbers<[1], [0], [0], [1], [0, 0, 1, 1], [], []>} : vector<8x16xf32>, vector<16x48xf32>, vector<8x48xf32> -> vector<8x48xf32>
    %572 = vector.broadcast %3 : vector<1x48xf32> to vector<8x48xf32>
    %573 = arith.addf %571, %572 : vector<8x48xf32>
    %574 = vector.extract_strided_slice %541 {offsets = [0, 0], sizes = [8, 16], strides = [1, 1]} : vector<8x48xf32> to vector<8x16xf32>
    %575 = vector.extract_strided_slice %573 {offsets = [0, 0], sizes = [8, 16], strides = [1, 1]} : vector<8x48xf32> to vector<8x16xf32>
    %576 = arith.addf %574, %575 : vector<8x16xf32>
    %577 = arith.negf %576 : vector<8x16xf32>
    %578 = math.exp %577 : vector<8x16xf32>
    %cst_140 = arith.constant 1.000000e+00 : f32
    %579 = vector.broadcast %cst_140 : f32 to vector<8x16xf32>
    %580 = arith.addf %579, %578 : vector<8x16xf32>
    %581 = arith.divf %579, %580 : vector<8x16xf32>
    %582 = vector.extract_strided_slice %541 {offsets = [0, 16], sizes = [8, 16], strides = [1, 1]} : vector<8x48xf32> to vector<8x16xf32>
    %583 = vector.extract_strided_slice %573 {offsets = [0, 16], sizes = [8, 16], strides = [1, 1]} : vector<8x48xf32> to vector<8x16xf32>
    %584 = arith.addf %582, %583 : vector<8x16xf32>
    %585 = arith.negf %584 : vector<8x16xf32>
    %586 = math.exp %585 : vector<8x16xf32>
    %cst_141 = arith.constant 1.000000e+00 : f32
    %587 = vector.broadcast %cst_141 : f32 to vector<8x16xf32>
    %588 = arith.addf %587, %586 : vector<8x16xf32>
    %589 = arith.divf %587, %588 : vector<8x16xf32>
    %590 = vector.extract_strided_slice %541 {offsets = [0, 32], sizes = [8, 16], strides = [1, 1]} : vector<8x48xf32> to vector<8x16xf32>
    %591 = vector.extract_strided_slice %573 {offsets = [0, 32], sizes = [8, 16], strides = [1, 1]} : vector<8x48xf32> to vector<8x16xf32>
    %592 = arith.mulf %581, %591 : vector<8x16xf32>
    %593 = arith.addf %590, %592 : vector<8x16xf32>
    %594 = math.tanh %593 : vector<8x16xf32>
    %cst_142 = arith.constant 1.000000e+00 : f32
    %595 = vector.broadcast %cst_142 : f32 to vector<8x16xf32>
    %596 = arith.subf %595, %589 : vector<8x16xf32>
    %597 = arith.mulf %596, %594 : vector<8x16xf32>
    %598 = arith.mulf %589, %524 : vector<8x16xf32>
    %599 = arith.addf %597, %598 : vector<8x16xf32>
    %600 = arith.index_cast %c7_i32_129 : i32 to index
    %c0_143 = arith.constant 0 : index
    %c0_144 = arith.constant 0 : index
    %601 = vector.load %arg12[%600, %c0_143, %c0_144] : memref<8x8x16xf32, #tpu.memory_space<vmem>>, vector<1x8x16xf32>
    %602 = vector.shape_cast %601 : vector<1x8x16xf32> to vector<8x16xf32>
    %603 = vector.shape_cast %570 : vector<8x16xf32> to vector<1x8x16xf32>
    tpu.vector_store %arg12[%600, %c0_143, %c0_144], %603 {strides = array<i32>} : memref<8x8x16xf32, #tpu.memory_space<vmem>>, vector<1x8x16xf32>,
    %604 = arith.index_cast %533 : i32 to index
    %c0_145 = arith.constant 0 : index
    %c0_146 = arith.constant 0 : index
    %605 = vector.load %arg13[%604, %c0_145, %c0_146] : memref<8x8x16xf32, #tpu.memory_space<vmem>>, vector<1x8x16xf32>
    %606 = vector.shape_cast %605 : vector<1x8x16xf32> to vector<8x16xf32>
    %607 = vector.shape_cast %599 : vector<8x16xf32> to vector<1x8x16xf32>
    tpu.vector_store %arg13[%604, %c0_145, %c0_146], %607 {strides = array<i32>} : memref<8x8x16xf32, #tpu.memory_space<vmem>>, vector<1x8x16xf32>,
    %c8_i32 = arith.constant 8 : i32
    %c0_147 = arith.constant 0 : index
    %c0_148 = arith.constant 0 : index
    %c0_149 = arith.constant 0 : index
    %608 = vector.load %arg11[%c0_147, %c0_148, %c0_149] : memref<2x8x16xf32, #tpu.memory_space<vmem>>, vector<1x8x16xf32>
    %609 = vector.shape_cast %608 : vector<1x8x16xf32> to vector<8x16xf32>
    %610 = vector.shape_cast %570 : vector<8x16xf32> to vector<1x8x16xf32>
    tpu.vector_store %arg11[%c0_147, %c0_148, %c0_149], %610 {strides = array<i32>} : memref<2x8x16xf32, #tpu.memory_space<vmem>>, vector<1x8x16xf32>,
    %c1_150 = arith.constant 1 : index
    %c0_151 = arith.constant 0 : index
    %c0_152 = arith.constant 0 : index
    %611 = vector.load %arg11[%c1_150, %c0_151, %c0_152] : memref<2x8x16xf32, #tpu.memory_space<vmem>>, vector<1x8x16xf32>
    %612 = vector.shape_cast %611 : vector<1x8x16xf32> to vector<8x16xf32>
    %613 = vector.shape_cast %599 : vector<8x16xf32> to vector<1x8x16xf32>
    tpu.vector_store %arg11[%c1_150, %c0_151, %c0_152], %613 {strides = array<i32>} : memref<2x8x16xf32, #tpu.memory_space<vmem>>, vector<1x8x16xf32>,
    %c0_153 = arith.constant 0 : index
    %c0_154 = arith.constant 0 : index
    %c0_155 = arith.constant 0 : index
    %614 = vector.load %arg12[%c0_153, %c0_154, %c0_155] : memref<8x8x16xf32, #tpu.memory_space<vmem>>, vector<8x8x16xf32>
    %c0_156 = arith.constant 0 : index
    %c0_157 = arith.constant 0 : index
    %c0_158 = arith.constant 0 : index
    %615 = vector.load %arg13[%c0_156, %c0_157, %c0_158] : memref<8x8x16xf32, #tpu.memory_space<vmem>>, vector<8x8x16xf32>
    %616 = tpu.concatenate %614, %615 in 2 : vector<8x8x16xf32>, vector<8x8x16xf32> -> vector<8x8x32xf32>
    %617 = vector.shape_cast %616 : vector<8x8x32xf32> to vector<64x32xf32>
    %c0_159 = arith.constant 0 : index
    %c0_160 = arith.constant 0 : index
    %618 = vector.load %arg7[%c0_159, %c0_160] : memref<32x32xf32, #tpu.memory_space<vmem>>, vector<32x32xf32>
    %c0_161 = arith.constant 0 : index
    %c0_162 = arith.constant 0 : index
    %619 = vector.load %arg8[%c0_161, %c0_162] : memref<1x32xf32, #tpu.memory_space<vmem>>, vector<1x32xf32>
    %c0_163 = arith.constant 0 : index
    %c0_164 = arith.constant 0 : index
    %620 = vector.load %arg9[%c0_163, %c0_164] : memref<32x1xf32, #tpu.memory_space<vmem>>, vector<32x1xf32>
    %cst_165 = arith.constant dense<0.000000e+00> : vector<64x32xf32>
    %621 = tpu.matmul %617, %618, %cst_165 {dimension_numbers = #tpu.dot_dimension_numbers<[1], [0], [0], [1], [0, 0, 1, 1], [], []>} : vector<64x32xf32>, vector<32x32xf32>, vector<64x32xf32> -> vector<64x32xf32>
    %622 = vector.broadcast %619 : vector<1x32xf32> to vector<64x32xf32>
    %623 = arith.addf %621, %622 : vector<64x32xf32>
    %624 = math.tanh %623 : vector<64x32xf32>
    %cst_166 = arith.constant dense<0.000000e+00> : vector<64x1xf32>
    %625 = tpu.matmul %624, %620, %cst_166 {dimension_numbers = #tpu.dot_dimension_numbers<[1], [0], [0], [1], [0, 0, 1, 1], [], []>} : vector<64x32xf32>, vector<32x1xf32>, vector<64x1xf32> -> vector<64x1xf32>
    %626 = math.tanh %625 : vector<64x1xf32>
    %627 = vector.shape_cast %626 : vector<64x1xf32> to vector<8x8x1xf32>
    %cst_167 = arith.constant dense<0xFF800000> : vector<8x1xf32>
    %628 = vector.multi_reduction <maximumf>, %627, %cst_167 [0] : vector<8x8x1xf32> to vector<8x1xf32>
    %629 = vector.shape_cast %628 : vector<8x1xf32> to vector<1x8x1xf32>
    %630 = vector.broadcast %629 : vector<1x8x1xf32> to vector<8x8x1xf32>
    %631 = arith.subf %627, %630 : vector<8x8x1xf32>
    %632 = math.exp %631 : vector<8x8x1xf32>
    %cst_168 = arith.constant dense<0.000000e+00> : vector<8x1xf32>
    %633 = vector.multi_reduction <add>, %632, %cst_168 [0] : vector<8x8x1xf32> to vector<8x1xf32>
    %634 = vector.shape_cast %633 : vector<8x1xf32> to vector<1x8x1xf32>
    %635 = vector.broadcast %634 : vector<1x8x1xf32> to vector<8x8x1xf32>
    %636 = arith.divf %632, %635 : vector<8x8x1xf32>
    %637 = vector.broadcast %636 : vector<8x8x1xf32> to vector<8x8x32xf32>
    %638 = arith.mulf %616, %637 : vector<8x8x32xf32>
    %cst_169 = arith.constant dense<0.000000e+00> : vector<8x32xf32>
    %639 = vector.multi_reduction <add>, %638, %cst_169 [0] : vector<8x8x32xf32> to vector<8x32xf32>
    %c0_170 = arith.constant 0 : index
    %c0_171 = arith.constant 0 : index
    %c0_172 = arith.constant 0 : index
    %640 = vector.load %arg10[%c0_170, %c0_171, %c0_172] : memref<1x8x32xf32, #tpu.memory_space<vmem>>, vector<1x8x32xf32>
    %641 = vector.shape_cast %640 : vector<1x8x32xf32> to vector<8x32xf32>
    %642 = vector.shape_cast %639 : vector<8x32xf32> to vector<1x8x32xf32>
    tpu.vector_store %arg10[%c0_170, %c0_171, %c0_172], %642 {strides = array<i32>} : memref<1x8x32xf32, #tpu.memory_space<vmem>>, vector<1x8x32xf32>,
    return
  }
  func.func @transform_0(%arg0: i32) -> (i32, i32, i32) {
    %c0_i32 = arith.constant 0 : i32
    %c0_i32_0 = arith.constant 0 : i32
    %c0_i32_1 = arith.constant 0 : i32
    return %c0_i32, %arg0, %c0_i32_0 : i32, i32, i32
  }
  func.func @transform_1(%arg0: i32) -> (i32, i32, i32) {
    %c0_i32 = arith.constant 0 : i32
    %c0_i32_0 = arith.constant 0 : i32
    %c0_i32_1 = arith.constant 0 : i32
    return %c0_i32, %arg0, %c0_i32_0 : i32, i32, i32
  }
  func.func @transform_2(%arg0: i32) -> (i32, i32) {
    %c0_i32 = arith.constant 0 : i32
    %c0_i32_0 = arith.constant 0 : i32
    %c0_i32_1 = arith.constant 0 : i32
    return %c0_i32, %c0_i32_0 : i32, i32
  }
  func.func @transform_3(%arg0: i32) -> (i32, i32) {
    %c0_i32 = arith.constant 0 : i32
    %c0_i32_0 = arith.constant 0 : i32
    %c0_i32_1 = arith.constant 0 : i32
    return %c0_i32, %c0_i32_0 : i32, i32
  }
  func.func @transform_4(%arg0: i32) -> (i32, i32) {
    %c0_i32 = arith.constant 0 : i32
    %c0_i32_0 = arith.constant 0 : i32
    %c0_i32_1 = arith.constant 0 : i32
    return %c0_i32, %c0_i32_0 : i32, i32
  }
  func.func @transform_5(%arg0: i32) -> (i32, i32) {
    %c0_i32 = arith.constant 0 : i32
    %c0_i32_0 = arith.constant 0 : i32
    %c0_i32_1 = arith.constant 0 : i32
    return %c0_i32, %c0_i32_0 : i32, i32
  }
  func.func @transform_6(%arg0: i32) -> (i32, i32) {
    %c0_i32 = arith.constant 0 : i32
    %c0_i32_0 = arith.constant 0 : i32
    %c0_i32_1 = arith.constant 0 : i32
    return %c0_i32, %c0_i32_0 : i32, i32
  }
  func.func @transform_7(%arg0: i32) -> (i32, i32) {
    %c0_i32 = arith.constant 0 : i32
    %c0_i32_0 = arith.constant 0 : i32
    %c0_i32_1 = arith.constant 0 : i32
    return %c0_i32, %c0_i32_0 : i32, i32
  }
  func.func @transform_8(%arg0: i32) -> (i32, i32) {
    %c0_i32 = arith.constant 0 : i32
    %c0_i32_0 = arith.constant 0 : i32
    %c0_i32_1 = arith.constant 0 : i32
    return %c0_i32, %c0_i32_0 : i32, i32
  }
  func.func @transform_9(%arg0: i32) -> (i32, i32, i32) {
    %c0_i32 = arith.constant 0 : i32
    %c0_i32_0 = arith.constant 0 : i32
    %c0_i32_1 = arith.constant 0 : i32
    return %c0_i32, %arg0, %c0_i32_0 : i32, i32, i32
  }
  func.func @transform_10(%arg0: i32) -> (i32, i32, i32) {
    %c0_i32 = arith.constant 0 : i32
    %c0_i32_0 = arith.constant 0 : i32
    %c0_i32_1 = arith.constant 0 : i32
    return %c0_i32, %arg0, %c0_i32_0 : i32, i32, i32
  }
}

</mosaic_0001>

<llo_original>
// kernel: word_att_forward.1
$region0: #{word_att_forward.1}
  #allocation0 [shape = 'u32[]', space=smem, size = 0x4, offset = 0x4, fixed_abs, tag = 'smem constant byte address 0x4 - core index']
  #allocation1 [shape = 'u32[72,128]{1,0:T(1,128)}', space=vmem, size = 0x9000, scoped, tag = 'internal scratch']
  #allocation2 [shape = 'f32[8,8,16]{2,1,0:T(8,128)}', space=vmem, size = 0x8000, scoped, tag = 'scratch operand']
  #allocation3 [shape = 'f32[8,8,16]{2,1,0:T(8,128)}', space=vmem, size = 0x8000, scoped, tag = 'scratch operand']
  %s0 = inlined_call_operand.vmem [shape: f32[8,8,96], index: 0, kind: input, shape index: {}]
  %s1 = inlined_call_operand.vmem [shape: f32[2,8,16], index: 1, kind: input, shape index: {}]
  %s2 = inlined_call_operand.vmem [shape: f32[16,48], index: 2, kind: input, shape index: {}]
  %s3 = inlined_call_operand.vmem [shape: f32[1,48], index: 3, kind: input, shape index: {}]
  %s4 = inlined_call_operand.vmem [shape: f32[16,48], index: 4, kind: input, shape index: {}]
  %s5 = inlined_call_operand.vmem [shape: f32[1,48], index: 5, kind: input, shape index: {}]
  %s6 = inlined_call_operand.vmem [shape: f32[32,32], index: 6, kind: input, shape index: {}]
  %s7 = inlined_call_operand.vmem [shape: f32[1,32], index: 7, kind: input, shape index: {}]
  %s8 = inlined_call_operand.vmem [shape: f32[32,1], index: 8, kind: input, shape index: {}]
  %s9 = inlined_call_operand.vmem [shape: f32[1,8,32], index: 9, kind: output, shape index: {0}]
  %s10 = inlined_call_operand.vmem [shape: f32[2,8,16], index: 10, kind: output, shape index: {1}]
  %11 = xla_tuple %s9, %s10
  %s12 = sld [smem:[#allocation0]]
  $region54: #{word_att_forward.1} parent=0
    _
  %s14 = ssub.s32 1, %s12
  %s15 = scalar_select 0, %s14, %s12
  // Predicated region
  $region2: #{word_att_forward.1} parent=0 // pred_check
    _
  $region3: #{word_att_forward.1} parent=0 // pred_check_branch
    %17 = sbr.rel (0) target = $region5
  $region4: #{word_att_forward.1} parent=0 // pred_region
    _
  $region5: #{word_att_forward.1} parent=0 // pred_fallthru
    _
  // Predicated region
  $region6: #{word_att_forward.1} parent=0 // pred_check
    _
  $region7: #{word_att_forward.1} parent=0 // pred_check_branch
    %19 = sbr.rel (0) target = $region9
  $region8: #{word_att_forward.1} parent=0 // pred_region
    _
  $region9: #{word_att_forward.1} parent=0 // pred_fallthru
    _
  // Predicated region
  $region10: #{word_att_forward.1} parent=0 // pred_check
    _
  $region11: #{word_att_forward.1} parent=0 // pred_check_branch
    %21 = sbr.rel (0) target = $region13
  $region12: #{word_att_forward.1} parent=0 // pred_region
    _
  $region13: #{word_att_forward.1} parent=0 // pred_fallthru
    _
  // Predicated region
  $region14: #{word_att_forward.1} parent=0 // pred_check
    _
  $region15: #{word_att_forward.1} parent=0 // pred_check_branch
    %23 = sbr.rel (0) target = $region17
  $region16: #{word_att_forward.1} parent=0 // pred_region
    _
  $region17: #{word_att_forward.1} parent=0 // pred_fallthru
    _
  // Predicated region
  $region18: #{word_att_forward.1} parent=0 // pred_check
    _
  $region19: #{word_att_forward.1} parent=0 // pred_check_branch
    %25 = sbr.rel (0) target = $region21
  $region20: #{word_att_forward.1} parent=0 // pred_region
    _
  $region21: #{word_att_forward.1} parent=0 // pred_fallthru
    _
  // Predicated region
  $region22: #{word_att_forward.1} parent=0 // pred_check
    _
  $region23: #{word_att_forward.1} parent=0 // pred_check_branch
    %27 = sbr.rel (0) target = $region25
  $region24: #{word_att_forward.1} parent=0 // pred_region
    _
  $region25: #{word_att_forward.1} parent=0 // pred_fallthru
    _
  // Predicated region
  $region26: #{word_att_forward.1} parent=0 // pred_check
    _
  $region27: #{word_att_forward.1} parent=0 // pred_check_branch
    %29 = sbr.rel (0) target = $region29
  $region28: #{word_att_forward.1} parent=0 // pred_region
    _
  $region29: #{word_att_forward.1} parent=0 // pred_fallthru
    _
  // Predicated region
  $region30: #{word_att_forward.1} parent=0 // pred_check
    _
  $region31: #{word_att_forward.1} parent=0 // pred_check_branch
    %31 = sbr.rel (0) target = $region33
  $region32: #{word_att_forward.1} parent=0 // pred_region
    _
  $region33: #{word_att_forward.1} parent=0 // pred_fallthru
    _
  // Predicated region
  $region34: #{word_att_forward.1} parent=0 // pred_check
    _
  $region35: #{word_att_forward.1} parent=0 // pred_check_branch
    %33 = sbr.rel (0) target = $region37
  $region36: #{word_att_forward.1} parent=0 // pred_region
    _
  $region37: #{word_att_forward.1} parent=0 // pred_fallthru
    _
  %v34 = vld [vmem:[%s2] sm:$0xff]
  %v35 = vld [vmem:[%s2 + $0x8] sm:$0xff]
  %v36 = vld [vmem:[%s4] sm:$0xff]
  %v37 = vld [vmem:[%s4 + $0x8] sm:$0xff]
  %v38 = vld [vmem:[%s3] sm:$0x1]
  %v39 = vld [vmem:[%s5] sm:$0x1]
  %v40 = vld [vmem:[%s1] sm:$0xff]
  %s41 = scalar_lea.vmem %s1, 8
  %v42 = vld [vmem:[%s41] sm:$0xff]
  %v43 = vld [vmem:[%s0] sm:$0xff]
  %s44 = scalar_lea.vmem %s0, 56
  %v45 = vld [vmem:[%s44] sm:$0xff]
  %v47 = vperm.slane %v38, 0
  %vm49 = vcmask 130048
  %v51 = vsel %vm49, %v40, 0
  %53 = vmatpush.msra.mxu0 0.0
  %54 = vmatpush.msra.mxu0 0.0
  %55 = vmatpush.msra.mxu0 0.0
  %56 = vmatpush.msra.mxu0 0.0
  %57 = vmatpush.msra.mxu0 0.0
  %58 = vmatpush.msra.mxu0 0.0
  %59 = vmatpush.msra.mxu0 0.0
  %60 = vmatpush.msra.mxu0 0.0
  %61 = vmatpush.msra.mxu0 0.0
  %62 = vmatpush.msra.mxu0 0.0
  %63 = vmatpush.msra.mxu0 0.0
  %64 = vmatpush.msra.mxu0 0.0
  %65 = vmatpush.msra.mxu0 0.0
  %66 = vmatpush.msra.mxu0 0.0
  %67 = vmatpush.msra.mxu0 %v35
  %68 = vmatpush.msra.mxu0 %v34
  %69 = vmatmul.f32.gmra.mxu0 %v51
  %v70 = vpop.f32.mrf.mxu0
  %v71 = vadd.f32 %v47, %v70
  %72 = vdwg.mxu0
  %v73 = vadd.f32 %v43, %v71
  %v74 = vxor.u32 %v73, 2147483648
  %v75 = vmul.f32 %v74, 1.442695
  %v76 = vpow.pop %v75
  %v77 = vadd.f32 %v76, 1.0
  %v78 = vrcp.pop %v77
  %v79 = vmul.f32 %v77, %v78
  %v80 = vsub.f32 1.0, %v79
  %v81 = vmul.f32 %v78, %v80
  %v82 = vadd.f32 %v78, %v81
  %vm83 = vweird.f32 %v77
  %vm84 = vweird.f32 %v78
  %vm85 = vmor %vm83, %vm84
  %v86 = vsel %vm85, %v78, %v82
  %v87 = vand.u32 2147483647, %v77
  %vm88 = vcmp.eq.f32.partialorder %v87, 8.507059e+37
  %v89 = vand.u32 %v77, 2147483648
  %v90 = vor.u32 1.1754944e-38, %v89
  %v91 = vsel %vm88, %v90, %v86
  %v92 = vmul.f32 1.0, %v91
  %94 = vrot.lane.b32.xlu0 %v71, 96
  %v95 = vpop.permute.xlu0 %94
  %v97 = vmul.f32 %v92, %v95
  %99 = vrot.lane.b32.xlu0 %v97, 32
  %v100 = vpop.permute.xlu0 %99
  %v102 = vadd.f32 %v43, %v100
  %v103 = vtanh.pop %v102
  %v104 = vsub.f32 1.0, %v92
  %106 = vrot.lane.b32.xlu0 %v103, 112
  %v107 = vpop.permute.xlu0 %106
  %v109 = vmul.f32 %v104, %v107
  %110 = vrot.lane.b32.xlu0 %v40, 16
  %v111 = vpop.permute.xlu0 %110
  %v113 = vmul.f32 %v92, %v111
  %v114 = vadd.f32 %v109, %v113
  %v116 = vperm.slane %v39, 0
  %v119 = vsel %vm49, %v42, 0
  %121 = vmatpush.msra.mxu0 0.0
  %122 = vmatpush.msra.mxu0 0.0
  %123 = vmatpush.msra.mxu0 0.0
  %124 = vmatpush.msra.mxu0 0.0
  %125 = vmatpush.msra.mxu0 0.0
  %126 = vmatpush.msra.mxu0 0.0
  %127 = vmatpush.msra.mxu0 0.0
  %128 = vmatpush.msra.mxu0 0.0
  %129 = vmatpush.msra.mxu0 0.0
  %130 = vmatpush.msra.mxu0 0.0
  %131 = vmatpush.msra.mxu0 0.0
  %132 = vmatpush.msra.mxu0 0.0
  %133 = vmatpush.msra.mxu0 0.0
  %134 = vmatpush.msra.mxu0 0.0
  %135 = vmatpush.msra.mxu0 %v37
  %136 = vmatpush.msra.mxu0 %v36
  %137 = vmatmul.f32.gmra.mxu0 %v119
  %v138 = vpop.f32.mrf.mxu0
  %v139 = vadd.f32 %v116, %v138
  %140 = vdwg.mxu0
  %142 = vrot.lane.b32.xlu0 %v139, 48
  %v143 = vpop.permute.xlu0 %142
  %v145 = vadd.f32 %v45, %v143
  %v146 = vxor.u32 %v145, 2147483648
  %v147 = vmul.f32 %v146, 1.442695
  %v148 = vpow.pop %v147
  %v149 = vadd.f32 %v148, 1.0
  %v150 = vrcp.pop %v149
  %v151 = vmul.f32 %v149, %v150
  %v152 = vsub.f32 1.0, %v151
  %v153 = vmul.f32 %v150, %v152
  %v154 = vadd.f32 %v150, %v153
  %vm155 = vweird.f32 %v149
  %vm156 = vweird.f32 %v150
  %vm157 = vmor %vm155, %vm156
  %v158 = vsel %vm157, %v150, %v154
  %v159 = vand.u32 2147483647, %v149
  %vm160 = vcmp.eq.f32.partialorder %v159, 8.507059e+37
  %v161 = vand.u32 %v149, 2147483648
  %v162 = vor.u32 1.1754944e-38, %v161
  %v163 = vsel %vm160, %v162, %v158
  %v164 = vmul.f32 1.0, %v163
  %165 = vrot.lane.b32.xlu0 %v139, 16
  %v166 = vpop.permute.xlu0 %165
  %v168 = vmul.f32 %v164, %v166
  %170 = vrot.lane.b32.xlu0 %v168, 32
  %v171 = vpop.permute.xlu0 %170
  %v173 = vadd.f32 %v45, %v171
  %v174 = vtanh.pop %v173
  %v175 = vsub.f32 1.0, %v164
  %177 = vrot.lane.b32.xlu0 %v174, 112
  %v178 = vpop.permute.xlu0 %177
  %v180 = vmul.f32 %v175, %v178
  %181 = vrot.lane.b32.xlu0 %v42, 64
  %v182 = vpop.permute.xlu0 %181
  %v184 = vmul.f32 %v164, %v182
  %v185 = vadd.f32 %v180, %v184
  %187 = vrot.lane.b32.xlu0 %v114, 112
  %v188 = vpop.permute.xlu0 %187
  %190 = vst.msk [vmem:[#allocation2] sm:$0xff] %vm49, %v188
  %192 = vrot.lane.b32.xlu0 %v185, 64
  %v193 = vpop.permute.xlu0 %192
  %s195 = scalar_lea.vmem [#allocation3], 56
  %196 = vst.msk [vmem:[%s195] sm:$0xff] %vm49, %v193
  %s197 = scalar_lea.vmem %s0, 8
  %v198 = vld [vmem:[%s197] sm:$0xff]
  %s199 = scalar_lea.vmem %s0, 48
  %v200 = vld [vmem:[%s199] sm:$0xff]
  %v201 = vsel %vm49, %v188, 0
  %203 = vmatpush.msra.mxu0 0.0
  %204 = vmatpush.msra.mxu0 0.0
  %205 = vmatpush.msra.mxu0 0.0
  %206 = vmatpush.msra.mxu0 0.0
  %207 = vmatpush.msra.mxu0 0.0
  %208 = vmatpush.msra.mxu0 0.0
  %209 = vmatpush.msra.mxu0 0.0
  %210 = vmatpush.msra.mxu0 0.0
  %211 = vmatpush.msra.mxu0 0.0
  %212 = vmatpush.msra.mxu0 0.0
  %213 = vmatpush.msra.mxu0 0.0
  %214 = vmatpush.msra.mxu0 0.0
  %215 = vmatpush.msra.mxu0 0.0
  %216 = vmatpush.msra.mxu0 0.0
  %217 = vmatpush.msra.mxu0 %v35
  %218 = vmatpush.msra.mxu0 %v34
  %219 = vmatmul.f32.gmra.mxu0 %v201
  %v220 = vpop.f32.mrf.mxu0
  %v221 = vadd.f32 %v47, %v220
  %222 = vdwg.mxu0
  %v223 = vadd.f32 %v198, %v221
  %v224 = vxor.u32 %v223, 2147483648
  %v225 = vmul.f32 %v224, 1.442695
  %v226 = vpow.pop %v225
  %v227 = vadd.f32 %v226, 1.0
  %v228 = vrcp.pop %v227
  %v229 = vmul.f32 %v227, %v228
  %v230 = vsub.f32 1.0, %v229
  %v231 = vmul.f32 %v228, %v230
  %v232 = vadd.f32 %v228, %v231
  %vm233 = vweird.f32 %v227
  %vm234 = vweird.f32 %v228
  %vm235 = vmor %vm233, %vm234
  %v236 = vsel %vm235, %v228, %v232
  %v237 = vand.u32 2147483647, %v227
  %vm238 = vcmp.eq.f32.partialorder %v237, 8.507059e+37
  %v239 = vand.u32 %v227, 2147483648
  %v240 = vor.u32 1.1754944e-38, %v239
  %v241 = vsel %vm238, %v240, %v236
  %v242 = vmul.f32 1.0, %v241
  %244 = vrot.lane.b32.xlu0 %v221, 96
  %v245 = vpop.permute.xlu0 %244
  %v247 = vmul.f32 %v242, %v245
  %249 = vrot.lane.b32.xlu0 %v247, 32
  %v250 = vpop.permute.xlu0 %249
  %v252 = vadd.f32 %v198, %v250
  %v253 = vtanh.pop %v252
  %v254 = vsub.f32 1.0, %v242
  %256 = vrot.lane.b32.xlu0 %v253, 112
  %v257 = vpop.permute.xlu0 %256
  %v259 = vmul.f32 %v254, %v257
  %v260 = vmul.f32 %v242, %v114
  %v261 = vadd.f32 %v259, %v260
  %v262 = vsel %vm49, %v193, 0
  %264 = vmatpush.msra.mxu0 0.0
  %265 = vmatpush.msra.mxu0 0.0
  %266 = vmatpush.msra.mxu0 0.0
  %267 = vmatpush.msra.mxu0 0.0
  %268 = vmatpush.msra.mxu0 0.0
  %269 = vmatpush.msra.mxu0 0.0
  %270 = vmatpush.msra.mxu0 0.0
  %271 = vmatpush.msra.mxu0 0.0
  %272 = vmatpush.msra.mxu0 0.0
  %273 = vmatpush.msra.mxu0 0.0
  %274 = vmatpush.msra.mxu0 0.0
  %275 = vmatpush.msra.mxu0 0.0
  %276 = vmatpush.msra.mxu0 0.0
  %277 = vmatpush.msra.mxu0 0.0
  %278 = vmatpush.msra.mxu0 %v37
  %279 = vmatpush.msra.mxu0 %v36
  %280 = vmatmul.f32.gmra.mxu0 %v262
  %v281 = vpop.f32.mrf.mxu0
  %v282 = vadd.f32 %v116, %v281
  %283 = vdwg.mxu0
  %285 = vrot.lane.b32.xlu0 %v282, 48
  %v286 = vpop.permute.xlu0 %285
  %v288 = vadd.f32 %v200, %v286
  %v289 = vxor.u32 %v288, 2147483648
  %v290 = vmul.f32 %v289, 1.442695
  %v291 = vpow.pop %v290
  %v292 = vadd.f32 %v291, 1.0
  %v293 = vrcp.pop %v292
  %v294 = vmul.f32 %v292, %v293
  %v295 = vsub.f32 1.0, %v294
  %v296 = vmul.f32 %v293, %v295
  %v297 = vadd.f32 %v293, %v296
  %vm298 = vweird.f32 %v292
  %vm299 = vweird.f32 %v293
  %vm300 = vmor %vm298, %vm299
  %v301 = vsel %vm300, %v293, %v297
  %v302 = vand.u32 2147483647, %v292
  %vm303 = vcmp.eq.f32.partialorder %v302, 8.507059e+37
  %v304 = vand.u32 %v292, 2147483648
  %v305 = vor.u32 1.1754944e-38, %v304
  %v306 = vsel %vm303, %v305, %v301
  %v307 = vmul.f32 1.0, %v306
  %308 = vrot.lane.b32.xlu0 %v282, 16
  %v309 = vpop.permute.xlu0 %308
  %v311 = vmul.f32 %v307, %v309
  %313 = vrot.lane.b32.xlu0 %v311, 32
  %v314 = vpop.permute.xlu0 %313
  %v316 = vadd.f32 %v200, %v314
  %v317 = vtanh.pop %v316
  %v318 = vsub.f32 1.0, %v307
  %320 = vrot.lane.b32.xlu0 %v317, 112
  %v321 = vpop.permute.xlu0 %320
  %v323 = vmul.f32 %v318, %v321
  %v324 = vmul.f32 %v307, %v185
  %v325 = vadd.f32 %v323, %v324
  %327 = vrot.lane.b32.xlu0 %v261, 112
  %v328 = vpop.permute.xlu0 %327
  %s330 = scalar_lea.vmem [#allocation2], 8
  %331 = vst.msk [vmem:[%s330] sm:$0xff] %vm49, %v328
  %333 = vrot.lane.b32.xlu0 %v325, 64
  %v334 = vpop.permute.xlu0 %333
  %s336 = scalar_lea.vmem [#allocation3], 48
  %337 = vst.msk [vmem:[%s336] sm:$0xff] %vm49, %v334
  %s338 = scalar_lea.vmem %s0, 16
  %v339 = vld [vmem:[%s338] sm:$0xff]
  %s340 = scalar_lea.vmem %s0, 40
  %v341 = vld [vmem:[%s340] sm:$0xff]
  %v342 = vsel %vm49, %v328, 0
  %344 = vmatpush.msra.mxu0 0.0
  %345 = vmatpush.msra.mxu0 0.0
  %346 = vmatpush.msra.mxu0 0.0
  %347 = vmatpush.msra.mxu0 0.0
  %348 = vmatpush.msra.mxu0 0.0
  %349 = vmatpush.msra.mxu0 0.0
  %350 = vmatpush.msra.mxu0 0.0
  %351 = vmatpush.msra.mxu0 0.0
  %352 = vmatpush.msra.mxu0 0.0
  %353 = vmatpush.msra.mxu0 0.0
  %354 = vmatpush.msra.mxu0 0.0
  %355 = vmatpush.msra.mxu0 0.0
  %356 = vmatpush.msra.mxu0 0.0
  %357 = vmatpush.msra.mxu0 0.0
  %358 = vmatpush.msra.mxu0 %v35
  %359 = vmatpush.msra.mxu0 %v34
  %360 = vmatmul.f32.gmra.mxu0 %v342
  %v361 = vpop.f32.mrf.mxu0
  %v362 = vadd.f32 %v47, %v361
  %363 = vdwg.mxu0
  %v364 = vadd.f32 %v339, %v362
  %v365 = vxor.u32 %v364, 2147483648
  %v366 = vmul.f32 %v365, 1.442695
  %v367 = vpow.pop %v366
  %v368 = vadd.f32 %v367, 1.0
  %v369 = vrcp.pop %v368
  %v370 = vmul.f32 %v368, %v369
  %v371 = vsub.f32 1.0, %v370
  %v372 = vmul.f32 %v369, %v371
  %v373 = vadd.f32 %v369, %v372
  %vm374 = vweird.f32 %v368
  %vm375 = vweird.f32 %v369
  %vm376 = vmor %vm374, %vm375
  %v377 = vsel %vm376, %v369, %v373
  %v378 = vand.u32 2147483647, %v368
  %vm379 = vcmp.eq.f32.partialorder %v378, 8.507059e+37
  %v380 = vand.u32 %v368, 2147483648
  %v381 = vor.u32 1.1754944e-38, %v380
  %v382 = vsel %vm379, %v381, %v377
  %v383 = vmul.f32 1.0, %v382
  %385 = vrot.lane.b32.xlu0 %v362, 96
  %v386 = vpop.permute.xlu0 %385
  %v388 = vmul.f32 %v383, %v386
  %390 = vrot.lane.b32.xlu0 %v388, 32
  %v391 = vpop.permute.xlu0 %390
  %v393 = vadd.f32 %v339, %v391
  %v394 = vtanh.pop %v393
  %v395 = vsub.f32 1.0, %v383
  %397 = vrot.lane.b32.xlu0 %v394, 112
  %v398 = vpop.permute.xlu0 %397
  %v400 = vmul.f32 %v395, %v398
  %v401 = vmul.f32 %v383, %v261
  %v402 = vadd.f32 %v400, %v401
  %v403 = vsel %vm49, %v334, 0
  %405 = vmatpush.msra.mxu0 0.0
  %406 = vmatpush.msra.mxu0 0.0
  %407 = vmatpush.msra.mxu0 0.0
  %408 = vmatpush.msra.mxu0 0.0
  %409 = vmatpush.msra.mxu0 0.0
  %410 = vmatpush.msra.mxu0 0.0
  %411 = vmatpush.msra.mxu0 0.0
  %412 = vmatpush.msra.mxu0 0.0
  %413 = vmatpush.msra.mxu0 0.0
  %414 = vmatpush.msra.mxu0 0.0
  %415 = vmatpush.msra.mxu0 0.0
  %416 = vmatpush.msra.mxu0 0.0
  %417 = vmatpush.msra.mxu0 0.0
  %418 = vmatpush.msra.mxu0 0.0
  %419 = vmatpush.msra.mxu0 %v37
  %420 = vmatpush.msra.mxu0 %v36
  %421 = vmatmul.f32.gmra.mxu0 %v403
  %v422 = vpop.f32.mrf.mxu0
  %v423 = vadd.f32 %v116, %v422
  %424 = vdwg.mxu0
  %426 = vrot.lane.b32.xlu0 %v423, 48
  %v427 = vpop.permute.xlu0 %426
  %v429 = vadd.f32 %v341, %v427
  %v430 = vxor.u32 %v429, 2147483648
  %v431 = vmul.f32 %v430, 1.442695
  %v432 = vpow.pop %v431
  %v433 = vadd.f32 %v432, 1.0
  %v434 = vrcp.pop %v433
  %v435 = vmul.f32 %v433, %v434
  %v436 = vsub.f32 1.0, %v435
  %v437 = vmul.f32 %v434, %v436
  %v438 = vadd.f32 %v434, %v437
  %vm439 = vweird.f32 %v433
  %vm440 = vweird.f32 %v434
  %vm441 = vmor %vm439, %vm440
  %v442 = vsel %vm441, %v434, %v438
  %v443 = vand.u32 2147483647, %v433
  %vm444 = vcmp.eq.f32.partialorder %v443, 8.507059e+37
  %v445 = vand.u32 %v433, 2147483648
  %v446 = vor.u32 1.1754944e-38, %v445
  %v447 = vsel %vm444, %v446, %v442
  %v448 = vmul.f32 1.0, %v447
  %449 = vrot.lane.b32.xlu0 %v423, 16
  %v450 = vpop.permute.xlu0 %449
  %v452 = vmul.f32 %v448, %v450
  %454 = vrot.lane.b32.xlu0 %v452, 32
  %v455 = vpop.permute.xlu0 %454
  %v457 = vadd.f32 %v341, %v455
  %v458 = vtanh.pop %v457
  %v459 = vsub.f32 1.0, %v448
  %461 = vrot.lane.b32.xlu0 %v458, 112
  %v462 = vpop.permute.xlu0 %461
  %v464 = vmul.f32 %v459, %v462
  %v465 = vmul.f32 %v448, %v325
  %v466 = vadd.f32 %v464, %v465
  %468 = vrot.lane.b32.xlu0 %v402, 112
  %v469 = vpop.permute.xlu0 %468
  %s471 = scalar_lea.vmem [#allocation2], 16
  %472 = vst.msk [vmem:[%s471] sm:$0xff] %vm49, %v469
  %474 = vrot.lane.b32.xlu0 %v466, 64
  %v475 = vpop.permute.xlu0 %474
  %s477 = scalar_lea.vmem [#allocation3], 40
  %478 = vst.msk [vmem:[%s477] sm:$0xff] %vm49, %v475
  %s479 = scalar_lea.vmem %s0, 24
  %v480 = vld [vmem:[%s479] sm:$0xff]
  %s481 = scalar_lea.vmem %s0, 32
  %v482 = vld [vmem:[%s481] sm:$0xff]
  %v483 = vsel %vm49, %v469, 0
  %485 = vmatpush.msra.mxu0 0.0
  %486 = vmatpush.msra.mxu0 0.0
  %487 = vmatpush.msra.mxu0 0.0
  %488 = vmatpush.msra.mxu0 0.0
  %489 = vmatpush.msra.mxu0 0.0
  %490 = vmatpush.msra.mxu0 0.0
  %491 = vmatpush.msra.mxu0 0.0
  %492 = vmatpush.msra.mxu0 0.0
  %493 = vmatpush.msra.mxu0 0.0
  %494 = vmatpush.msra.mxu0 0.0
  %495 = vmatpush.msra.mxu0 0.0
  %496 = vmatpush.msra.mxu0 0.0
  %497 = vmatpush.msra.mxu0 0.0
  %498 = vmatpush.msra.mxu0 0.0
  %499 = vmatpush.msra.mxu0 %v35
  %500 = vmatpush.msra.mxu0 %v34
  %501 = vmatmul.f32.gmra.mxu0 %v483
  %v502 = vpop.f32.mrf.mxu0
  %v503 = vadd.f32 %v47, %v502
  %504 = vdwg.mxu0
  %v505 = vadd.f32 %v480, %v503
  %v506 = vxor.u32 %v505, 2147483648
  %v507 = vmul.f32 %v506, 1.442695
  %v508 = vpow.pop %v507
  %v509 = vadd.f32 %v508, 1.0
  %v510 = vrcp.pop %v509
  %v511 = vmul.f32 %v509, %v510
  %v512 = vsub.f32 1.0, %v511
  %v513 = vmul.f32 %v510, %v512
  %v514 = vadd.f32 %v510, %v513
  %vm515 = vweird.f32 %v509
  %vm516 = vweird.f32 %v510
  %vm517 = vmor %vm515, %vm516
  %v518 = vsel %vm517, %v510, %v514
  %v519 = vand.u32 2147483647, %v509
  %vm520 = vcmp.eq.f32.partialorder %v519, 8.507059e+37
  %v521 = vand.u32 %v509, 2147483648
  %v522 = vor.u32 1.1754944e-38, %v521
  %v523 = vsel %vm520, %v522, %v518
  %v524 = vmul.f32 1.0, %v523
  %526 = vrot.lane.b32.xlu0 %v503, 96
  %v527 = vpop.permute.xlu0 %526
  %v529 = vmul.f32 %v524, %v527
  %531 = vrot.lane.b32.xlu0 %v529, 32
  %v532 = vpop.permute.xlu0 %531
  %v534 = vadd.f32 %v480, %v532
  %v535 = vtanh.pop %v534
  %v536 = vsub.f32 1.0, %v524
  %538 = vrot.lane.b32.xlu0 %v535, 112
  %v539 = vpop.permute.xlu0 %538
  %v541 = vmul.f32 %v536, %v539
  %v542 = vmul.f32 %v524, %v402
  %v543 = vadd.f32 %v541, %v542
  %v544 = vsel %vm49, %v475, 0
  %546 = vmatpush.msra.mxu0 0.0
  %547 = vmatpush.msra.mxu0 0.0
  %548 = vmatpush.msra.mxu0 0.0
  %549 = vmatpush.msra.mxu0 0.0
  %550 = vmatpush.msra.mxu0 0.0
  %551 = vmatpush.msra.mxu0 0.0
  %552 = vmatpush.msra.mxu0 0.0
  %553 = vmatpush.msra.mxu0 0.0
  %554 = vmatpush.msra.mxu0 0.0
  %555 = vmatpush.msra.mxu0 0.0
  %556 = vmatpush.msra.mxu0 0.0
  %557 = vmatpush.msra.mxu0 0.0
  %558 = vmatpush.msra.mxu0 0.0
  %559 = vmatpush.msra.mxu0 0.0
  %560 = vmatpush.msra.mxu0 %v37
  %561 = vmatpush.msra.mxu0 %v36
  %562 = vmatmul.f32.gmra.mxu0 %v544
  %v563 = vpop.f32.mrf.mxu0
  %v564 = vadd.f32 %v116, %v563
  %565 = vdwg.mxu0
  %567 = vrot.lane.b32.xlu0 %v564, 48
  %v568 = vpop.permute.xlu0 %567
  %v570 = vadd.f32 %v482, %v568
  %v571 = vxor.u32 %v570, 2147483648
  %v572 = vmul.f32 %v571, 1.442695
  %v573 = vpow.pop %v572
  %v574 = vadd.f32 %v573, 1.0
  %v575 = vrcp.pop %v574
  %v576 = vmul.f32 %v574, %v575
  %v577 = vsub.f32 1.0, %v576
  %v578 = vmul.f32 %v575, %v577
  %v579 = vadd.f32 %v575, %v578
  %vm580 = vweird.f32 %v574
  %vm581 = vweird.f32 %v575
  %vm582 = vmor %vm580, %vm581
  %v583 = vsel %vm582, %v575, %v579
  %v584 = vand.u32 2147483647, %v574
  %vm585 = vcmp.eq.f32.partialorder %v584, 8.507059e+37
  %v586 = vand.u32 %v574, 2147483648
  %v587 = vor.u32 1.1754944e-38, %v586
  %v588 = vsel %vm585, %v587, %v583
  %v589 = vmul.f32 1.0, %v588
  %590 = vrot.lane.b32.xlu0 %v564, 16
  %v591 = vpop.permute.xlu0 %590
  %v593 = vmul.f32 %v589, %v591
  %595 = vrot.lane.b32.xlu0 %v593, 32
  %v596 = vpop.permute.xlu0 %595
  %v598 = vadd.f32 %v482, %v596
  %v599 = vtanh.pop %v598
  %v600 = vsub.f32 1.0, %v589
  %602 = vrot.lane.b32.xlu0 %v599, 112
  %v603 = vpop.permute.xlu0 %602
  %v605 = vmul.f32 %v600, %v603
  %v606 = vmul.f32 %v589, %v466
  %v607 = vadd.f32 %v605, %v606
  %609 = vrot.lane.b32.xlu0 %v543, 112
  %v610 = vpop.permute.xlu0 %609
  %s612 = scalar_lea.vmem [#allocation2], 24
  %613 = vst.msk [vmem:[%s612] sm:$0xff] %vm49, %v610
  %615 = vrot.lane.b32.xlu0 %v607, 64
  %v616 = vpop.permute.xlu0 %615
  %s618 = scalar_lea.vmem [#allocation3], 32
  %619 = vst.msk [vmem:[%s618] sm:$0xff] %vm49, %v616
  %v620 = vld [vmem:[%s481] sm:$0xff]
  %v621 = vld [vmem:[%s479] sm:$0xff]
  %v622 = vsel %vm49, %v610, 0
  %624 = vmatpush.msra.mxu0 0.0
  %625 = vmatpush.msra.mxu0 0.0
  %626 = vmatpush.msra.mxu0 0.0
  %627 = vmatpush.msra.mxu0 0.0
  %628 = vmatpush.msra.mxu0 0.0
  %629 = vmatpush.msra.mxu0 0.0
  %630 = vmatpush.msra.mxu0 0.0
  %631 = vmatpush.msra.mxu0 0.0
  %632 = vmatpush.msra.mxu0 0.0
  %633 = vmatpush.msra.mxu0 0.0
  %634 = vmatpush.msra.mxu0 0.0
  %635 = vmatpush.msra.mxu0 0.0
  %636 = vmatpush.msra.mxu0 0.0
  %637 = vmatpush.msra.mxu0 0.0
  %638 = vmatpush.msra.mxu0 %v35
  %639 = vmatpush.msra.mxu0 %v34
  %640 = vmatmul.f32.gmra.mxu0 %v622
  %v641 = vpop.f32.mrf.mxu0
  %v642 = vadd.f32 %v47, %v641
  %643 = vdwg.mxu0
  %v644 = vadd.f32 %v620, %v642
  %v645 = vxor.u32 %v644, 2147483648
  %v646 = vmul.f32 %v645, 1.442695
  %v647 = vpow.pop %v646
  %v648 = vadd.f32 %v647, 1.0
  %v649 = vrcp.pop %v648
  %v650 = vmul.f32 %v648, %v649
  %v651 = vsub.f32 1.0, %v650
  %v652 = vmul.f32 %v649, %v651
  %v653 = vadd.f32 %v649, %v652
  %vm654 = vweird.f32 %v648
  %vm655 = vweird.f32 %v649
  %vm656 = vmor %vm654, %vm655
  %v657 = vsel %vm656, %v649, %v653
  %v658 = vand.u32 2147483647, %v648
  %vm659 = vcmp.eq.f32.partialorder %v658, 8.507059e+37
  %v660 = vand.u32 %v648, 2147483648
  %v661 = vor.u32 1.1754944e-38, %v660
  %v662 = vsel %vm659, %v661, %v657
  %v663 = vmul.f32 1.0, %v662
  %665 = vrot.lane.b32.xlu0 %v642, 96
  %v666 = vpop.permute.xlu0 %665
  %v668 = vmul.f32 %v663, %v666
  %670 = vrot.lane.b32.xlu0 %v668, 32
  %v671 = vpop.permute.xlu0 %670
  %v673 = vadd.f32 %v620, %v671
  %v674 = vtanh.pop %v673
  %v675 = vsub.f32 1.0, %v663
  %677 = vrot.lane.b32.xlu0 %v674, 112
  %v678 = vpop.permute.xlu0 %677
  %v680 = vmul.f32 %v675, %v678
  %v681 = vmul.f32 %v663, %v543
  %v682 = vadd.f32 %v680, %v681
  %v683 = vsel %vm49, %v616, 0
  %685 = vmatpush.msra.mxu0 0.0
  %686 = vmatpush.msra.mxu0 0.0
  %687 = vmatpush.msra.mxu0 0.0
  %688 = vmatpush.msra.mxu0 0.0
  %689 = vmatpush.msra.mxu0 0.0
  %690 = vmatpush.msra.mxu0 0.0
  %691 = vmatpush.msra.mxu0 0.0
  %692 = vmatpush.msra.mxu0 0.0
  %693 = vmatpush.msra.mxu0 0.0
  %694 = vmatpush.msra.mxu0 0.0
  %695 = vmatpush.msra.mxu0 0.0
  %696 = vmatpush.msra.mxu0 0.0
  %697 = vmatpush.msra.mxu0 0.0
  %698 = vmatpush.msra.mxu0 0.0
  %699 = vmatpush.msra.mxu0 %v37
  %700 = vmatpush.msra.mxu0 %v36
  %701 = vmatmul.f32.gmra.mxu0 %v683
  %v702 = vpop.f32.mrf.mxu0
  %v703 = vadd.f32 %v116, %v702
  %704 = vdwg.mxu0
  %706 = vrot.lane.b32.xlu0 %v703, 48
  %v707 = vpop.permute.xlu0 %706
  %v709 = vadd.f32 %v621, %v707
  %v710 = vxor.u32 %v709, 2147483648
  %v711 = vmul.f32 %v710, 1.442695
  %v712 = vpow.pop %v711
  %v713 = vadd.f32 %v712, 1.0
  %v714 = vrcp.pop %v713
  %v715 = vmul.f32 %v713, %v714
  %v716 = vsub.f32 1.0, %v715
  %v717 = vmul.f32 %v714, %v716
  %v718 = vadd.f32 %v714, %v717
  %vm719 = vweird.f32 %v713
  %vm720 = vweird.f32 %v714
  %vm721 = vmor %vm719, %vm720
  %v722 = vsel %vm721, %v714, %v718
  %v723 = vand.u32 2147483647, %v713
  %vm724 = vcmp.eq.f32.partialorder %v723, 8.507059e+37
  %v725 = vand.u32 %v713, 2147483648
  %v726 = vor.u32 1.1754944e-38, %v725
  %v727 = vsel %vm724, %v726, %v722
  %v728 = vmul.f32 1.0, %v727
  %729 = vrot.lane.b32.xlu0 %v703, 16
  %v730 = vpop.permute.xlu0 %729
  %v732 = vmul.f32 %v728, %v730
  %734 = vrot.lane.b32.xlu0 %v732, 32
  %v735 = vpop.permute.xlu0 %734
  %v737 = vadd.f32 %v621, %v735
  %v738 = vtanh.pop %v737
  %v739 = vsub.f32 1.0, %v728
  %741 = vrot.lane.b32.xlu0 %v738, 112
  %v742 = vpop.permute.xlu0 %741
  %v744 = vmul.f32 %v739, %v742
  %v745 = vmul.f32 %v728, %v607
  %v746 = vadd.f32 %v744, %v745
  %748 = vrot.lane.b32.xlu0 %v682, 112
  %v749 = vpop.permute.xlu0 %748
  %s751 = scalar_lea.vmem [#allocation2], 32
  %752 = vst.msk [vmem:[%s751] sm:$0xff] %vm49, %v749
  %754 = vrot.lane.b32.xlu0 %v746, 64
  %v755 = vpop.permute.xlu0 %754
  %s757 = scalar_lea.vmem [#allocation3], 24
  %758 = vst.msk [vmem:[%s757] sm:$0xff] %vm49, %v755
  %v759 = vld [vmem:[%s340] sm:$0xff]
  %v760 = vld [vmem:[%s338] sm:$0xff]
  %v761 = vsel %vm49, %v749, 0
  %763 = vmatpush.msra.mxu0 0.0
  %764 = vmatpush.msra.mxu0 0.0
  %765 = vmatpush.msra.mxu0 0.0
  %766 = vmatpush.msra.mxu0 0.0
  %767 = vmatpush.msra.mxu0 0.0
  %768 = vmatpush.msra.mxu0 0.0
  %769 = vmatpush.msra.mxu0 0.0
  %770 = vmatpush.msra.mxu0 0.0
  %771 = vmatpush.msra.mxu0 0.0
  %772 = vmatpush.msra.mxu0 0.0
  %773 = vmatpush.msra.mxu0 0.0
  %774 = vmatpush.msra.mxu0 0.0
  %775 = vmatpush.msra.mxu0 0.0
  %776 = vmatpush.msra.mxu0 0.0
  %777 = vmatpush.msra.mxu0 %v35
  %778 = vmatpush.msra.mxu0 %v34
  %779 = vmatmul.f32.gmra.mxu0 %v761
  %v780 = vpop.f32.mrf.mxu0
  %v781 = vadd.f32 %v47, %v780
  %782 = vdwg.mxu0
  %v783 = vadd.f32 %v759, %v781
  %v784 = vxor.u32 %v783, 2147483648
  %v785 = vmul.f32 %v784, 1.442695
  %v786 = vpow.pop %v785
  %v787 = vadd.f32 %v786, 1.0
  %v788 = vrcp.pop %v787
  %v789 = vmul.f32 %v787, %v788
  %v790 = vsub.f32 1.0, %v789
  %v791 = vmul.f32 %v788, %v790
  %v792 = vadd.f32 %v788, %v791
  %vm793 = vweird.f32 %v787
  %vm794 = vweird.f32 %v788
  %vm795 = vmor %vm793, %vm794
  %v796 = vsel %vm795, %v788, %v792
  %v797 = vand.u32 2147483647, %v787
  %vm798 = vcmp.eq.f32.partialorder %v797, 8.507059e+37
  %v799 = vand.u32 %v787, 2147483648
  %v800 = vor.u32 1.1754944e-38, %v799
  %v801 = vsel %vm798, %v800, %v796
  %v802 = vmul.f32 1.0, %v801
  %804 = vrot.lane.b32.xlu0 %v781, 96
  %v805 = vpop.permute.xlu0 %804
  %v807 = vmul.f32 %v802, %v805
  %809 = vrot.lane.b32.xlu0 %v807, 32
  %v810 = vpop.permute.xlu0 %809
  %v812 = vadd.f32 %v759, %v810
  %v813 = vtanh.pop %v812
  %v814 = vsub.f32 1.0, %v802
  %816 = vrot.lane.b32.xlu0 %v813, 112
  %v817 = vpop.permute.xlu0 %816
  %v819 = vmul.f32 %v814, %v817
  %v820 = vmul.f32 %v802, %v682
  %v821 = vadd.f32 %v819, %v820
  %v822 = vsel %vm49, %v755, 0
  %824 = vmatpush.msra.mxu0 0.0
  %825 = vmatpush.msra.mxu0 0.0
  %826 = vmatpush.msra.mxu0 0.0
  %827 = vmatpush.msra.mxu0 0.0
  %828 = vmatpush.msra.mxu0 0.0
  %829 = vmatpush.msra.mxu0 0.0
  %830 = vmatpush.msra.mxu0 0.0
  %831 = vmatpush.msra.mxu0 0.0
  %832 = vmatpush.msra.mxu0 0.0
  %833 = vmatpush.msra.mxu0 0.0
  %834 = vmatpush.msra.mxu0 0.0
  %835 = vmatpush.msra.mxu0 0.0
  %836 = vmatpush.msra.mxu0 0.0
  %837 = vmatpush.msra.mxu0 0.0
  %838 = vmatpush.msra.mxu0 %v37
  %839 = vmatpush.msra.mxu0 %v36
  %840 = vmatmul.f32.gmra.mxu0 %v822
  %v841 = vpop.f32.mrf.mxu0
  %v842 = vadd.f32 %v116, %v841
  %843 = vdwg.mxu0
  %845 = vrot.lane.b32.xlu0 %v842, 48
  %v846 = vpop.permute.xlu0 %845
  %v848 = vadd.f32 %v760, %v846
  %v849 = vxor.u32 %v848, 2147483648
  %v850 = vmul.f32 %v849, 1.442695
  %v851 = vpow.pop %v850
  %v852 = vadd.f32 %v851, 1.0
  %v853 = vrcp.pop %v852
  %v854 = vmul.f32 %v852, %v853
  %v855 = vsub.f32 1.0, %v854
  %v856 = vmul.f32 %v853, %v855
  %v857 = vadd.f32 %v853, %v856
  %vm858 = vweird.f32 %v852
  %vm859 = vweird.f32 %v853
  %vm860 = vmor %vm858, %vm859
  %v861 = vsel %vm860, %v853, %v857
  %v862 = vand.u32 2147483647, %v852
  %vm863 = vcmp.eq.f32.partialorder %v862, 8.507059e+37
  %v864 = vand.u32 %v852, 2147483648
  %v865 = vor.u32 1.1754944e-38, %v864
  %v866 = vsel %vm863, %v865, %v861
  %v867 = vmul.f32 1.0, %v866
  %868 = vrot.lane.b32.xlu0 %v842, 16
  %v869 = vpop.permute.xlu0 %868
  %v871 = vmul.f32 %v867, %v869
  %873 = vrot.lane.b32.xlu0 %v871, 32
  %v874 = vpop.permute.xlu0 %873
  %v876 = vadd.f32 %v760, %v874
  %v877 = vtanh.pop %v876
  %v878 = vsub.f32 1.0, %v867
  %880 = vrot.lane.b32.xlu0 %v877, 112
  %v881 = vpop.permute.xlu0 %880
  %v883 = vmul.f32 %v878, %v881
  %v884 = vmul.f32 %v867, %v746
  %v885 = vadd.f32 %v883, %v884
  %887 = vrot.lane.b32.xlu0 %v821, 112
  %v888 = vpop.permute.xlu0 %887
  %s890 = scalar_lea.vmem [#allocation2], 40
  %891 = vst.msk [vmem:[%s890] sm:$0xff] %vm49, %v888
  %893 = vrot.lane.b32.xlu0 %v885, 64
  %v894 = vpop.permute.xlu0 %893
  %s896 = scalar_lea.vmem [#allocation3], 16
  %897 = vst.msk [vmem:[%s896] sm:$0xff] %vm49, %v894
  %v898 = vld [vmem:[%s199] sm:$0xff]
  %v899 = vld [vmem:[%s197] sm:$0xff]
  %v900 = vsel %vm49, %v888, 0
  %902 = vmatpush.msra.mxu0 0.0
  %903 = vmatpush.msra.mxu0 0.0
  %904 = vmatpush.msra.mxu0 0.0
  %905 = vmatpush.msra.mxu0 0.0
  %906 = vmatpush.msra.mxu0 0.0
  %907 = vmatpush.msra.mxu0 0.0
  %908 = vmatpush.msra.mxu0 0.0
  %909 = vmatpush.msra.mxu0 0.0
  %910 = vmatpush.msra.mxu0 0.0
  %911 = vmatpush.msra.mxu0 0.0
  %912 = vmatpush.msra.mxu0 0.0
  %913 = vmatpush.msra.mxu0 0.0
  %914 = vmatpush.msra.mxu0 0.0
  %915 = vmatpush.msra.mxu0 0.0
  %916 = vmatpush.msra.mxu0 %v35
  %917 = vmatpush.msra.mxu0 %v34
  %918 = vmatmul.f32.gmra.mxu0 %v900
  %v919 = vpop.f32.mrf.mxu0
  %v920 = vadd.f32 %v47, %v919
  %921 = vdwg.mxu0
  %v922 = vadd.f32 %v898, %v920
  %v923 = vxor.u32 %v922, 2147483648
  %v924 = vmul.f32 %v923, 1.442695
  %v925 = vpow.pop %v924
  %v926 = vadd.f32 %v925, 1.0
  %v927 = vrcp.pop %v926
  %v928 = vmul.f32 %v926, %v927
  %v929 = vsub.f32 1.0, %v928
  %v930 = vmul.f32 %v927, %v929
  %v931 = vadd.f32 %v927, %v930
  %vm932 = vweird.f32 %v926
  %vm933 = vweird.f32 %v927
  %vm934 = vmor %vm932, %vm933
  %v935 = vsel %vm934, %v927, %v931
  %v936 = vand.u32 2147483647, %v926
  %vm937 = vcmp.eq.f32.partialorder %v936, 8.507059e+37
  %v938 = vand.u32 %v926, 2147483648
  %v939 = vor.u32 1.1754944e-38, %v938
  %v940 = vsel %vm937, %v939, %v935
  %v941 = vmul.f32 1.0, %v940
  %943 = vrot.lane.b32.xlu0 %v920, 96
  %v944 = vpop.permute.xlu0 %943
  %v946 = vmul.f32 %v941, %v944
  %948 = vrot.lane.b32.xlu0 %v946, 32
  %v949 = vpop.permute.xlu0 %948
  %v951 = vadd.f32 %v898, %v949
  %v952 = vtanh.pop %v951
  %v953 = vsub.f32 1.0, %v941
  %955 = vrot.lane.b32.xlu0 %v952, 112
  %v956 = vpop.permute.xlu0 %955
  %v958 = vmul.f32 %v953, %v956
  %v959 = vmul.f32 %v941, %v821
  %v960 = vadd.f32 %v958, %v959
  %v961 = vsel %vm49, %v894, 0
  %963 = vmatpush.msra.mxu0 0.0
  %964 = vmatpush.msra.mxu0 0.0
  %965 = vmatpush.msra.mxu0 0.0
  %966 = vmatpush.msra.mxu0 0.0
  %967 = vmatpush.msra.mxu0 0.0
  %968 = vmatpush.msra.mxu0 0.0
  %969 = vmatpush.msra.mxu0 0.0
  %970 = vmatpush.msra.mxu0 0.0
  %971 = vmatpush.msra.mxu0 0.0
  %972 = vmatpush.msra.mxu0 0.0
  %973 = vmatpush.msra.mxu0 0.0
  %974 = vmatpush.msra.mxu0 0.0
  %975 = vmatpush.msra.mxu0 0.0
  %976 = vmatpush.msra.mxu0 0.0
  %977 = vmatpush.msra.mxu0 %v37
  %978 = vmatpush.msra.mxu0 %v36
  %979 = vmatmul.f32.gmra.mxu0 %v961
  %v980 = vpop.f32.mrf.mxu0
  %v981 = vadd.f32 %v116, %v980
  %982 = vdwg.mxu0
  %984 = vrot.lane.b32.xlu0 %v981, 48
  %v985 = vpop.permute.xlu0 %984
  %v987 = vadd.f32 %v899, %v985
  %v988 = vxor.u32 %v987, 2147483648
  %v989 = vmul.f32 %v988, 1.442695
  %v990 = vpow.pop %v989
  %v991 = vadd.f32 %v990, 1.0
  %v992 = vrcp.pop %v991
  %v993 = vmul.f32 %v991, %v992
  %v994 = vsub.f32 1.0, %v993
  %v995 = vmul.f32 %v992, %v994
  %v996 = vadd.f32 %v992, %v995
  %vm997 = vweird.f32 %v991
  %vm998 = vweird.f32 %v992
  %vm999 = vmor %vm997, %vm998
  %v1000 = vsel %vm999, %v992, %v996
  %v1001 = vand.u32 2147483647, %v991
  %vm1002 = vcmp.eq.f32.partialorder %v1001, 8.507059e+37
  %v1003 = vand.u32 %v991, 2147483648
  %v1004 = vor.u32 1.1754944e-38, %v1003
  %v1005 = vsel %vm1002, %v1004, %v1000
  %v1006 = vmul.f32 1.0, %v1005
  %1007 = vrot.lane.b32.xlu0 %v981, 16
  %v1008 = vpop.permute.xlu0 %1007
  %v1010 = vmul.f32 %v1006, %v1008
  %1012 = vrot.lane.b32.xlu0 %v1010, 32
  %v1013 = vpop.permute.xlu0 %1012
  %v1015 = vadd.f32 %v899, %v1013
  %v1016 = vtanh.pop %v1015
  %v1017 = vsub.f32 1.0, %v1006
  %1019 = vrot.lane.b32.xlu0 %v1016, 112
  %v1020 = vpop.permute.xlu0 %1019
  %v1022 = vmul.f32 %v1017, %v1020
  %v1023 = vmul.f32 %v1006, %v885
  %v1024 = vadd.f32 %v1022, %v1023
  %1026 = vrot.lane.b32.xlu0 %v960, 112
  %v1027 = vpop.permute.xlu0 %1026
  %s1029 = scalar_lea.vmem [#allocation2], 48
  %1030 = vst.msk [vmem:[%s1029] sm:$0xff] %vm49, %v1027
  %1032 = vrot.lane.b32.xlu0 %v1024, 64
  %v1033 = vpop.permute.xlu0 %1032
  %s1035 = scalar_lea.vmem [#allocation3], 8
  %1036 = vst.msk [vmem:[%s1035] sm:$0xff] %vm49, %v1033
  %v1037 = vld [vmem:[%s44] sm:$0xff]
  %v1038 = vld [vmem:[%s0] sm:$0xff]
  %v1039 = vsel %vm49, %v1027, 0
  %1041 = vmatpush.msra.mxu0 0.0
  %1042 = vmatpush.msra.mxu0 0.0
  %1043 = vmatpush.msra.mxu0 0.0
  %1044 = vmatpush.msra.mxu0 0.0
  %1045 = vmatpush.msra.mxu0 0.0
  %1046 = vmatpush.msra.mxu0 0.0
  %1047 = vmatpush.msra.mxu0 0.0
  %1048 = vmatpush.msra.mxu0 0.0
  %1049 = vmatpush.msra.mxu0 0.0
  %1050 = vmatpush.msra.mxu0 0.0
  %1051 = vmatpush.msra.mxu0 0.0
  %1052 = vmatpush.msra.mxu0 0.0
  %1053 = vmatpush.msra.mxu0 0.0
  %1054 = vmatpush.msra.mxu0 0.0
  %1055 = vmatpush.msra.mxu0 %v35
  %1056 = vmatpush.msra.mxu0 %v34
  %1057 = vmatmul.f32.gmra.mxu0 %v1039
  %v1058 = vpop.f32.mrf.mxu0
  %v1059 = vadd.f32 %v47, %v1058
  %1060 = vdwg.mxu0
  %v1061 = vadd.f32 %v1037, %v1059
  %v1062 = vxor.u32 %v1061, 2147483648
  %v1063 = vmul.f32 %v1062, 1.442695
  %v1064 = vpow.pop %v1063
  %v1065 = vadd.f32 %v1064, 1.0
  %v1066 = vrcp.pop %v1065
  %v1067 = vmul.f32 %v1065, %v1066
  %v1068 = vsub.f32 1.0, %v1067
  %v1069 = vmul.f32 %v1066, %v1068
  %v1070 = vadd.f32 %v1066, %v1069
  %vm1071 = vweird.f32 %v1065
  %vm1072 = vweird.f32 %v1066
  %vm1073 = vmor %vm1071, %vm1072
  %v1074 = vsel %vm1073, %v1066, %v1070
  %v1075 = vand.u32 2147483647, %v1065
  %vm1076 = vcmp.eq.f32.partialorder %v1075, 8.507059e+37
  %v1077 = vand.u32 %v1065, 2147483648
  %v1078 = vor.u32 1.1754944e-38, %v1077
  %v1079 = vsel %vm1076, %v1078, %v1074
  %v1080 = vmul.f32 1.0, %v1079
  %1082 = vrot.lane.b32.xlu0 %v1059, 96
  %v1083 = vpop.permute.xlu0 %1082
  %v1085 = vmul.f32 %v1080, %v1083
  %1087 = vrot.lane.b32.xlu0 %v1085, 32
  %v1088 = vpop.permute.xlu0 %1087
  %v1090 = vadd.f32 %v1037, %v1088
  %v1091 = vtanh.pop %v1090
  %v1092 = vsub.f32 1.0, %v1080
  %1094 = vrot.lane.b32.xlu0 %v1091, 112
  %v1095 = vpop.permute.xlu0 %1094
  %v1097 = vmul.f32 %v1092, %v1095
  %v1098 = vmul.f32 %v1080, %v960
  %v1099 = vadd.f32 %v1097, %v1098
  %v1100 = vsel %vm49, %v1033, 0
  %1102 = vmatpush.msra.mxu0 0.0
  %1103 = vmatpush.msra.mxu0 0.0
  %1104 = vmatpush.msra.mxu0 0.0
  %1105 = vmatpush.msra.mxu0 0.0
  %1106 = vmatpush.msra.mxu0 0.0
  %1107 = vmatpush.msra.mxu0 0.0
  %1108 = vmatpush.msra.mxu0 0.0
  %1109 = vmatpush.msra.mxu0 0.0
  %1110 = vmatpush.msra.mxu0 0.0
  %1111 = vmatpush.msra.mxu0 0.0
  %1112 = vmatpush.msra.mxu0 0.0
  %1113 = vmatpush.msra.mxu0 0.0
  %1114 = vmatpush.msra.mxu0 0.0
  %1115 = vmatpush.msra.mxu0 0.0
  %1116 = vmatpush.msra.mxu0 %v37
  %1117 = vmatpush.msra.mxu0 %v36
  %1118 = vmatmul.f32.gmra.mxu0 %v1100
  %v1119 = vpop.f32.mrf.mxu0
  %v1120 = vadd.f32 %v116, %v1119
  %1121 = vdwg.mxu0
  %1123 = vrot.lane.b32.xlu0 %v1120, 48
  %v1124 = vpop.permute.xlu0 %1123
  %v1126 = vadd.f32 %v1038, %v1124
  %v1127 = vxor.u32 %v1126, 2147483648
  %v1128 = vmul.f32 %v1127, 1.442695
  %v1129 = vpow.pop %v1128
  %v1130 = vadd.f32 %v1129, 1.0
  %v1131 = vrcp.pop %v1130
  %v1132 = vmul.f32 %v1130, %v1131
  %v1133 = vsub.f32 1.0, %v1132
  %v1134 = vmul.f32 %v1131, %v1133
  %v1135 = vadd.f32 %v1131, %v1134
  %vm1136 = vweird.f32 %v1130
  %vm1137 = vweird.f32 %v1131
  %vm1138 = vmor %vm1136, %vm1137
  %v1139 = vsel %vm1138, %v1131, %v1135
  %v1140 = vand.u32 2147483647, %v1130
  %vm1141 = vcmp.eq.f32.partialorder %v1140, 8.507059e+37
  %v1142 = vand.u32 %v1130, 2147483648
  %v1143 = vor.u32 1.1754944e-38, %v1142
  %v1144 = vsel %vm1141, %v1143, %v1139
  %v1145 = vmul.f32 1.0, %v1144
  %1146 = vrot.lane.b32.xlu0 %v1120, 16
  %v1147 = vpop.permute.xlu0 %1146
  %v1149 = vmul.f32 %v1145, %v1147
  %1151 = vrot.lane.b32.xlu0 %v1149, 32
  %v1152 = vpop.permute.xlu0 %1151
  %v1154 = vadd.f32 %v1038, %v1152
  %v1155 = vtanh.pop %v1154
  %v1156 = vsub.f32 1.0, %v1145
  %1158 = vrot.lane.b32.xlu0 %v1155, 112
  %v1159 = vpop.permute.xlu0 %1158
  %v1161 = vmul.f32 %v1156, %v1159
  %v1162 = vmul.f32 %v1145, %v1024
  %v1163 = vadd.f32 %v1161, %v1162
  %1165 = vrot.lane.b32.xlu0 %v1099, 112
  %v1166 = vpop.permute.xlu0 %1165
  %s1168 = scalar_lea.vmem [#allocation2], 56
  %1169 = vst.msk [vmem:[%s1168] sm:$0xff] %vm49, %v1166
  %1171 = vrot.lane.b32.xlu0 %v1163, 64
  %v1172 = vpop.permute.xlu0 %1171
  %1174 = vst.msk [vmem:[#allocation3] sm:$0xff] %vm49, %v1172
  %1175 = vst.msk [vmem:[%s10] sm:$0xff] %vm49, %v1166
  %s1176 = scalar_lea.vmem %s10, 8
  %1177 = vst.msk [vmem:[%s1176] sm:$0xff] %vm49, %v1172
  %v1178 = vld [vmem:[#allocation2] sm:$0xff]
  %v1179 = vld [vmem:[#allocation2 + $0x8] sm:$0xff]
  %v1180 = vld [vmem:[#allocation2 + $0x10] sm:$0xff]
  %v1181 = vld [vmem:[#allocation2 + $0x18] sm:$0xff]
  %v1182 = vld [vmem:[#allocation2 + $0x20] sm:$0xff]
  %v1183 = vld [vmem:[#allocation2 + $0x28] sm:$0xff]
  %v1184 = vld [vmem:[#allocation2 + $0x30] sm:$0xff]
  %v1185 = vld [vmem:[#allocation2 + $0x38] sm:$0xff]
  %v1186 = vld [vmem:[#allocation3] sm:$0xff]
  %v1187 = vld [vmem:[#allocation3 + $0x8] sm:$0xff]
  %v1188 = vld [vmem:[#allocation3 + $0x10] sm:$0xff]
  %v1189 = vld [vmem:[#allocation3 + $0x18] sm:$0xff]
  %v1190 = vld [vmem:[#allocation3 + $0x20] sm:$0xff]
  %v1191 = vld [vmem:[#allocation3 + $0x28] sm:$0xff]
  %v1192 = vld [vmem:[#allocation3 + $0x30] sm:$0xff]
  %v1193 = vld [vmem:[#allocation3 + $0x38] sm:$0xff]
  %1202 = vrot.lane.b32.xlu0 %v1186, 16
  %v1203 = vpop.permute.xlu0 %1202
  %1204 = vrot.lane.b32.xlu0 %v1187, 16
  %v1205 = vpop.permute.xlu0 %1204
  %1206 = vrot.lane.b32.xlu0 %v1188, 16
  %v1207 = vpop.permute.xlu0 %1206
  %1208 = vrot.lane.b32.xlu0 %v1189, 16
  %v1209 = vpop.permute.xlu0 %1208
  %1210 = vrot.lane.b32.xlu0 %v1190, 16
  %v1211 = vpop.permute.xlu0 %1210
  %1212 = vrot.lane.b32.xlu0 %v1191, 16
  %v1213 = vpop.permute.xlu0 %1212
  %1214 = vrot.lane.b32.xlu0 %v1192, 16
  %v1215 = vpop.permute.xlu0 %1214
  %1216 = vrot.lane.b32.xlu0 %v1193, 16
  %v1217 = vpop.permute.xlu0 %1216
  %v1226 = vsel %vm49, %v1178, %v1203
  %v1227 = vsel %vm49, %v1179, %v1205
  %v1228 = vsel %vm49, %v1180, %v1207
  %v1229 = vsel %vm49, %v1181, %v1209
  %v1230 = vsel %vm49, %v1182, %v1211
  %v1231 = vsel %vm49, %v1183, %v1213
  %v1232 = vsel %vm49, %v1184, %v1215
  %v1233 = vsel %vm49, %v1185, %v1217
  %v1234 = vld [vmem:[%s6] sm:$0xff]
  %v1235 = vld [vmem:[%s6 + $0x8] sm:$0xff]
  %v1236 = vld [vmem:[%s6 + $0x10] sm:$0xff]
  %v1237 = vld [vmem:[%s6 + $0x18] sm:$0xff]
  %v1238 = vld [vmem:[%s7] sm:$0x1]
  %v1239 = vld [vmem:[%s8] sm:$0xff]
  %v1240 = vld [vmem:[%s8 + $0x8] sm:$0xff]
  %v1241 = vld [vmem:[%s8 + $0x10] sm:$0xff]
  %v1242 = vld [vmem:[%s8 + $0x18] sm:$0xff]
  %v1244 = vperm.slane %v1238, 0
  %vm1246 = vcmask 261120
  %v1248 = vsel %vm1246, %v1226, 0
  %v1251 = vsel %vm1246, %v1227, 0
  %v1254 = vsel %vm1246, %v1228, 0
  %v1257 = vsel %vm1246, %v1229, 0
  %v1260 = vsel %vm1246, %v1230, 0
  %v1263 = vsel %vm1246, %v1231, 0
  %v1266 = vsel %vm1246, %v1232, 0
  %v1269 = vsel %vm1246, %v1233, 0
  %1271 = vmatpush.msra.mxu0 0.0
  %1272 = vmatpush.msra.mxu0 0.0
  %1273 = vmatpush.msra.mxu0 0.0
  %1274 = vmatpush.msra.mxu0 0.0
  %1275 = vmatpush.msra.mxu0 0.0
  %1276 = vmatpush.msra.mxu0 0.0
  %1277 = vmatpush.msra.mxu0 0.0
  %1278 = vmatpush.msra.mxu0 0.0
  %1279 = vmatpush.msra.mxu0 0.0
  %1280 = vmatpush.msra.mxu0 0.0
  %1281 = vmatpush.msra.mxu0 0.0
  %1282 = vmatpush.msra.mxu0 0.0
  %1283 = vmatpush.msra.mxu0 %v1237
  %1284 = vmatpush.msra.mxu0 %v1236
  %1285 = vmatpush.msra.mxu0 %v1235
  %1286 = vmatpush.msra.mxu0 %v1234
  %1287 = vmatmul.f32.gmra.mxu0 %v1248
  %v1288 = vpop.f32.mrf.mxu0
  %v1289 = vadd.f32 %v1244, %v1288
  %1290 = vmatmul.f32.gmra.mxu0 %v1251
  %v1291 = vpop.f32.mrf.mxu0
  %v1292 = vadd.f32 %v1244, %v1291
  %1293 = vmatmul.f32.gmra.mxu0 %v1254
  %v1294 = vpop.f32.mrf.mxu0
  %v1295 = vadd.f32 %v1244, %v1294
  %1296 = vmatmul.f32.gmra.mxu0 %v1257
  %v1297 = vpop.f32.mrf.mxu0
  %v1298 = vadd.f32 %v1244, %v1297
  %1299 = vmatmul.f32.gmra.mxu0 %v1260
  %v1300 = vpop.f32.mrf.mxu0
  %v1301 = vadd.f32 %v1244, %v1300
  %1302 = vmatmul.f32.gmra.mxu0 %v1263
  %v1303 = vpop.f32.mrf.mxu0
  %v1304 = vadd.f32 %v1244, %v1303
  %1305 = vmatmul.f32.gmra.mxu0 %v1266
  %v1306 = vpop.f32.mrf.mxu0
  %v1307 = vadd.f32 %v1244, %v1306
  %1308 = vmatmul.f32.gmra.mxu0 %v1269
  %v1309 = vpop.f32.mrf.mxu0
  %v1310 = vadd.f32 %v1244, %v1309
  %1311 = vdwg.mxu0
  %v1312 = vtanh.pop %v1289
  %v1313 = vtanh.pop %v1292
  %v1314 = vtanh.pop %v1295
  %v1315 = vtanh.pop %v1298
  %v1316 = vtanh.pop %v1301
  %v1317 = vtanh.pop %v1304
  %v1318 = vtanh.pop %v1307
  %v1319 = vtanh.pop %v1310
  %v1321 = vsel %vm1246, %v1312, 0
  %v1324 = vsel %vm1246, %v1313, 0
  %v1327 = vsel %vm1246, %v1314, 0
  %v1330 = vsel %vm1246, %v1315, 0
  %v1333 = vsel %vm1246, %v1316, 0
  %v1336 = vsel %vm1246, %v1317, 0
  %v1339 = vsel %vm1246, %v1318, 0
  %v1342 = vsel %vm1246, %v1319, 0
  %1344 = vmatpush.msra.mxu0 0.0
  %1345 = vmatpush.msra.mxu0 0.0
  %1346 = vmatpush.msra.mxu0 0.0
  %1347 = vmatpush.msra.mxu0 0.0
  %1348 = vmatpush.msra.mxu0 0.0
  %1349 = vmatpush.msra.mxu0 0.0
  %1350 = vmatpush.msra.mxu0 0.0
  %1351 = vmatpush.msra.mxu0 0.0
  %1352 = vmatpush.msra.mxu0 0.0
  %1353 = vmatpush.msra.mxu0 0.0
  %1354 = vmatpush.msra.mxu0 0.0
  %1355 = vmatpush.msra.mxu0 0.0
  %1356 = vmatpush.msra.mxu0 %v1242
  %1357 = vmatpush.msra.mxu0 %v1241
  %1358 = vmatpush.msra.mxu0 %v1240
  %1359 = vmatpush.msra.mxu0 %v1239
  %1360 = vmatmul.f32.gmra.mxu0 %v1321
  %v1361 = vpop.f32.mrf.mxu0
  %v1362 = vadd.f32 0.0, %v1361
  %1363 = vmatmul.f32.gmra.mxu0 %v1324
  %v1364 = vpop.f32.mrf.mxu0
  %v1365 = vadd.f32 0.0, %v1364
  %1366 = vmatmul.f32.gmra.mxu0 %v1327
  %v1367 = vpop.f32.mrf.mxu0
  %v1368 = vadd.f32 0.0, %v1367
  %1369 = vmatmul.f32.gmra.mxu0 %v1330
  %v1370 = vpop.f32.mrf.mxu0
  %v1371 = vadd.f32 0.0, %v1370
  %1372 = vmatmul.f32.gmra.mxu0 %v1333
  %v1373 = vpop.f32.mrf.mxu0
  %v1374 = vadd.f32 0.0, %v1373
  %1375 = vmatmul.f32.gmra.mxu0 %v1336
  %v1376 = vpop.f32.mrf.mxu0
  %v1377 = vadd.f32 0.0, %v1376
  %1378 = vmatmul.f32.gmra.mxu0 %v1339
  %v1379 = vpop.f32.mrf.mxu0
  %v1380 = vadd.f32 0.0, %v1379
  %1381 = vmatmul.f32.gmra.mxu0 %v1342
  %v1382 = vpop.f32.mrf.mxu0
  %v1383 = vadd.f32 0.0, %v1382
  %1384 = vdwg.mxu0
  %v1385 = vtanh.pop %v1362
  %v1386 = vtanh.pop %v1365
  %v1387 = vtanh.pop %v1368
  %v1388 = vtanh.pop %v1371
  %v1389 = vtanh.pop %v1374
  %v1390 = vtanh.pop %v1377
  %v1391 = vtanh.pop %v1380
  %v1392 = vtanh.pop %v1383
  %vm1393 = vcmask 7168
  %v1394 = vsel %vm1393, %v1385, -inf
  %v1395 = vsel %vm1393, %v1386, -inf
  %v1396 = vsel %vm1393, %v1387, -inf
  %v1397 = vsel %vm1393, %v1388, -inf
  %v1398 = vsel %vm1393, %v1389, -inf
  %v1399 = vmax.f32 %v1394, %v1398
  %v1400 = vsel %vm1393, %v1390, -inf
  %v1401 = vmax.f32 %v1395, %v1400
  %v1402 = vsel %vm1393, %v1391, -inf
  %v1403 = vmax.f32 %v1396, %v1402
  %v1404 = vsel %vm1393, %v1392, -inf
  %v1405 = vmax.f32 %v1397, %v1404
  %v1406 = vmax.f32 %v1399, %v1401
  %v1407 = vmax.f32 %v1403, %v1405
  %v1408 = vmax.f32 %v1406, %v1407
  %v1409 = vsub.f32 %v1385, %v1408
  %v1410 = vsub.f32 %v1386, %v1408
  %v1411 = vsub.f32 %v1387, %v1408
  %v1412 = vsub.f32 %v1388, %v1408
  %v1413 = vsub.f32 %v1389, %v1408
  %v1414 = vsub.f32 %v1390, %v1408
  %v1415 = vsub.f32 %v1391, %v1408
  %v1416 = vsub.f32 %v1392, %v1408
  %v1417 = vmul.f32 %v1409, 1.442695
  %v1418 = vpow.pop %v1417
  %v1419 = vmul.f32 %v1410, 1.442695
  %v1420 = vpow.pop %v1419
  %v1421 = vmul.f32 %v1411, 1.442695
  %v1422 = vpow.pop %v1421
  %v1423 = vmul.f32 %v1412, 1.442695
  %v1424 = vpow.pop %v1423
  %v1425 = vmul.f32 %v1413, 1.442695
  %v1426 = vpow.pop %v1425
  %v1427 = vmul.f32 %v1414, 1.442695
  %v1428 = vpow.pop %v1427
  %v1429 = vmul.f32 %v1415, 1.442695
  %v1430 = vpow.pop %v1429
  %v1431 = vmul.f32 %v1416, 1.442695
  %v1432 = vpow.pop %v1431
  %v1433 = vsel %vm1393, %v1418, 0.0
  %v1434 = vsel %vm1393, %v1420, 0.0
  %v1435 = vadd.f32 %v1433, %v1434
  %v1436 = vsel %vm1393, %v1422, 0.0
  %v1437 = vadd.f32 %v1435, %v1436
  %v1438 = vsel %vm1393, %v1424, 0.0
  %v1439 = vadd.f32 %v1437, %v1438
  %v1440 = vsel %vm1393, %v1426, 0.0
  %v1441 = vadd.f32 %v1439, %v1440
  %v1442 = vsel %vm1393, %v1428, 0.0
  %v1443 = vadd.f32 %v1441, %v1442
  %v1444 = vsel %vm1393, %v1430, 0.0
  %v1445 = vadd.f32 %v1443, %v1444
  %v1446 = vsel %vm1393, %v1432, 0.0
  %v1447 = vadd.f32 %v1445, %v1446
  %v1448 = vrcp.pop %v1447
  %v1449 = vmul.f32 %v1447, %v1448
  %v1450 = vsub.f32 1.0, %v1449
  %v1451 = vmul.f32 %v1448, %v1450
  %v1452 = vadd.f32 %v1448, %v1451
  %vm1453 = vweird.f32 %v1447
  %vm1454 = vweird.f32 %v1448
  %vm1455 = vmor %vm1453, %vm1454
  %v1456 = vsel %vm1455, %v1448, %v1452
  %v1457 = vand.u32 2147483647, %v1447
  %vm1458 = vcmp.eq.f32.partialorder %v1457, 8.507059e+37
  %v1459 = vand.u32 %v1447, 2147483648
  %v1460 = vor.u32 1.1754944e-38, %v1459
  %v1461 = vsel %vm1458, %v1460, %v1456
  %v1462 = vmul.f32 %v1418, %v1461
  %v1463 = vmul.f32 %v1420, %v1461
  %v1464 = vmul.f32 %v1422, %v1461
  %v1465 = vmul.f32 %v1424, %v1461
  %v1466 = vmul.f32 %v1426, %v1461
  %v1467 = vmul.f32 %v1428, %v1461
  %v1468 = vmul.f32 %v1430, %v1461
  %v1469 = vmul.f32 %v1432, %v1461
  %1471 = vset.pattern.permute.xlu0 0
  %1472 = vperm.xlu0 %1471, %v1462
  %v1473 = vpop.permute.xlu0 %1472
  %1476 = vset.pattern.permute.xlu0 0
  %1477 = vperm.xlu0 %1476, %v1463
  %v1478 = vpop.permute.xlu0 %1477
  %1481 = vset.pattern.permute.xlu0 0
  %1482 = vperm.xlu0 %1481, %v1464
  %v1483 = vpop.permute.xlu0 %1482
  %1486 = vset.pattern.permute.xlu0 0
  %1487 = vperm.xlu0 %1486, %v1465
  %v1488 = vpop.permute.xlu0 %1487
  %1491 = vset.pattern.permute.xlu0 0
  %1492 = vperm.xlu0 %1491, %v1466
  %v1493 = vpop.permute.xlu0 %1492
  %1496 = vset.pattern.permute.xlu0 0
  %1497 = vperm.xlu0 %1496, %v1467
  %v1498 = vpop.permute.xlu0 %1497
  %1501 = vset.pattern.permute.xlu0 0
  %1502 = vperm.xlu0 %1501, %v1468
  %v1503 = vpop.permute.xlu0 %1502
  %1506 = vset.pattern.permute.xlu0 0
  %1507 = vperm.xlu0 %1506, %v1469
  %v1508 = vpop.permute.xlu0 %1507
  %v1510 = vmul.f32 %v1226, %v1473
  %v1511 = vmul.f32 %v1227, %v1478
  %v1512 = vmul.f32 %v1228, %v1483
  %v1513 = vmul.f32 %v1229, %v1488
  %v1514 = vmul.f32 %v1230, %v1493
  %v1515 = vmul.f32 %v1231, %v1498
  %v1516 = vmul.f32 %v1232, %v1503
  %v1517 = vmul.f32 %v1233, %v1508
  %v1518 = vsel %vm1246, %v1510, 0.0
  %v1519 = vsel %vm1246, %v1511, 0.0
  %v1520 = vadd.f32 %v1518, %v1519
  %v1521 = vsel %vm1246, %v1512, 0.0
  %v1522 = vadd.f32 %v1520, %v1521
  %v1523 = vsel %vm1246, %v1513, 0.0
  %v1524 = vadd.f32 %v1522, %v1523
  %v1525 = vsel %vm1246, %v1514, 0.0
  %v1526 = vadd.f32 %v1524, %v1525
  %v1527 = vsel %vm1246, %v1515, 0.0
  %v1528 = vadd.f32 %v1526, %v1527
  %v1529 = vsel %vm1246, %v1516, 0.0
  %v1530 = vadd.f32 %v1528, %v1529
  %v1531 = vsel %vm1246, %v1517, 0.0
  %v1532 = vadd.f32 %v1530, %v1531
  %1533 = vst.msk [vmem:[%s9] sm:$0xff] %vm1246, %v1532
  // Predicated region
  $region38: #{word_att_forward.1} parent=0 // pred_check
    _
  $region39: #{word_att_forward.1} parent=0 // pred_check_branch
    %1535 = sbr.rel (0) target = $region41
  $region40: #{word_att_forward.1} parent=0 // pred_region
    _
  $region41: #{word_att_forward.1} parent=0 // pred_fallthru
    _
  // Predicated region
  $region42: #{word_att_forward.1} parent=0 // pred_check
    _
  $region43: #{word_att_forward.1} parent=0 // pred_check_branch
    %1537 = sbr.rel (0) target = $region45
  $region44: #{word_att_forward.1} parent=0 // pred_region
    _
  $region45: #{word_att_forward.1} parent=0 // pred_fallthru
    _
  // Predicated region
  $region46: #{word_att_forward.1} parent=0 // pred_check
    _
  $region47: #{word_att_forward.1} parent=0 // pred_check_branch
    %1539 = sbr.rel (0) target = $region49
  $region48: #{word_att_forward.1} parent=0 // pred_region
    _
  $region49: #{word_att_forward.1} parent=0 // pred_fallthru
    _
  // Predicated region
  $region50: #{word_att_forward.1} parent=0 // pred_check
    _
  $region51: #{word_att_forward.1} parent=0 // pred_check_branch
    %1541 = sbr.rel (0) target = $region53
  $region52: #{word_att_forward.1} parent=0 // pred_region
    _
  $region53: #{word_att_forward.1} parent=0 // pred_fallthru
    _

</llo_original>
